<compile_context>
chip_gen: v7x
topology: tpu7x:2x2x1
jax: 0.10.0
libtpu: 0.0.40
codegen_flags: <defaults>
</compile_context>

<pallas_src>
import numpy as np
import jax
import jax.numpy as jnp
from jax.experimental import pallas as pl
from jax.experimental.pallas import tpu as pltpu

# Needed so the pure-JAX reference (einsum / conv) is accurate enough for the
# tight correctness asserts below.  Production kernels may relax this (review).
jax.config.update("jax_default_matmul_precision", "highest")


# ------------------------------------------------------------------
# Interpolation matrix for 1-D linear resize with align_corners=True
# ------------------------------------------------------------------
def linear_interp_matrix(L_in, L_out):
    A = np.zeros((L_out, L_in), dtype=np.float32)
    if L_in == 1 or L_out == 1:
        A[:, 0] = 1.0
        return A
    for o in range(L_out):
        c = o * (L_in - 1) / (L_out - 1)
        i0 = min(int(np.floor(c)), L_in - 1)
        i1 = min(i0 + 1, L_in - 1)
        f = c - i0
        A[o, i0] += 1.0 - f
        A[o, i1] += f
    return A


# ------------------------------------------------------------------
# Kernel 1: Conv3d(C -> 1, 3x3x3, pad=1, no bias), lane-dense layout.
# The padded (H+2, W+2) plane is flattened into the lane dimension, so every
# (kh, kw) kernel tap is a lane-offset window read of the same slab instead of
# a tiny W-wide slice.  Result is kept on padded-plane coordinates so the fused
# kernel downstream can read the interior pixels directly (no extra HBM pass).
# ------------------------------------------------------------------
def _make_conv_kernel(C, D, Wp, HWp, E):
    # x_ref: (C, D+2, HWp + 2E)  zero-padded input (plane flattened into lanes)
    # w_ref: (C*27,)             SMEM scalars, [c, kd, kh, kw] order
    # o_ref: (D, HWp)            conv output on padded-plane coordinates
    def kernel(x_ref, w_ref, o_ref):
        acc = jnp.zeros((D, HWp), jnp.float32)
        for kh in range(3):
            for kw in range(3):
                # (kh, kw) shift == lane-offset window inside the flattened plane
                off = (kh - 1) * Wp + (kw - 1)
                start = E + off
                for c in range(C):
                    for kd in range(3):
                        wv = w_ref[((c * 3 + kd) * 3 + kh) * 3 + kw]
                        acc = acc + wv * x_ref[c, kd:kd + D, start:start + HWp]
        o_ref[...] = acc
    return kernel


def conv3d_1out(x, weight):
    """x: [BN, C, D, H, W] f32, weight: [1, C, 3, 3, 3] f32.

    Returns the conv result on padded-plane coordinates: [BN, D, (H+2)*(W+2)],
    where output pixel (d, h, w) lives at lane (h+1)*(W+2) + (w+1).
    """
    BN, C, D, H, W = x.shape
    Wp = W + 2
    HWp = (H + 2) * Wp
    E = W + 3  # lane margin so every tap window stays in bounds (|off| <= W+3)

    xp = jnp.pad(x, ((0, 0), (0, 0), (1, 1), (1, 1), (1, 1)))   # zero-pad D/H/W
    xp = xp.reshape(BN, C, D + 2, HWp)
    xp = jnp.pad(xp, ((0, 0), (0, 0), (0, 0), (E, E)))          # lane margin
    w_flat = weight.astype(jnp.float32).reshape(-1)             # (C*27,)

    kernel = _make_conv_kernel(C, D, Wp, HWp, E)
    return pl.pallas_call(
        kernel,
        grid=(BN,),
        in_specs=[
            pl.BlockSpec((None, C, D + 2, HWp + 2 * E), lambda i: (i, 0, 0, 0)),
            pl.BlockSpec(memory_space=pltpu.MemorySpace.SMEM),
        ],
        out_specs=pl.BlockSpec((None, D, HWp), lambda i: (i, 0, 0)),
        out_shape=jax.ShapeDtypeStruct((BN, D, HWp), jnp.float32),
        compiler_params=pltpu.CompilerParams(
            dimension_semantics=("parallel",)),
    )(xp, w_flat)


# ------------------------------------------------------------------
# Kernel 2 (fused): trilinear upsample (align_corners=True) + softmax over the
# depth axis + expected depth, one (b, n) item per grid step, all in VMEM.
#
#   W-resize : per input H row, (D, W) @ AW^T           (small MXU matmuls)
#   H-resize : 2-tap linear interp per output row; the (D, W_up) column blocks
#              are written into a lane-dense (D, H_up*W_up) VMEM scratch
#   D-resize : AD (D_up, D) @ X (D, H_up*W_up)           (single big MXU matmul)
#   softmax over depth (sublane axis) + expected depth (VMEM depth_samples)
#
# Outputs are lane-dense (D_up, H_up*W_up) / (1, H_up*W_up) tiles whose HBM
# layout is byte-identical to the row-major [D_up, H_up, W_up] volume, so the
# wrapper reshapes are metadata-only.
# ------------------------------------------------------------------
def _make_fused_kernel(D, H, W, s, plane_w, plane_off, h_taps):
    D_up, H_up, W_up = D * s, H * s, W * s
    HW_up = H_up * W_up

    def kernel(v_ref, ad_ref, awt_ref, ds_ref, vol_ref, sm_ref, pred_ref, x_ref):
        awt = awt_ref[...]                                     # (W, W_up)

        # --- W-axis resize: one small matmul per input H row -----------------
        yw = []
        for h in range(H):
            start = h * plane_w + plane_off
            row = v_ref[:, start:start + W]                    # (D, W)
            yw.append(jnp.dot(row, awt,
                              preferred_element_type=jnp.float32,
                              precision=jax.lax.Precision.HIGHEST))  # (D, W_up)

        # --- H-axis resize: 2-tap interp, assembled into a lane-dense tile ---
        for q, (i0, w0, i1, w1) in enumerate(h_taps):
            c = w0 * yw[i0]
            if w1 != 0.0:
                c = c + w1 * yw[i1]
            x_ref[:, q * W_up:(q + 1) * W_up] = c              # (D, W_up) block
        x = x_ref[...]                                         # (D, H_up*W_up)

        # --- D-axis resize: single lane-dense MXU matmul ----------------------
        vol = jnp.dot(ad_ref[...], x,
                      preferred_element_type=jnp.float32,
                      precision=jax.lax.Precision.HIGHEST)      # (D_up, HW_up)
        vol_ref[...] = vol

        # --- softmax over depth + expected depth ------------------------------
        m = jnp.max(vol, axis=0, keepdims=True)
        e = jnp.exp(vol - m)
        ssum = jnp.sum(e, axis=0, keepdims=True)
        sm = e / ssum
        sm_ref[...] = sm
        # depth_samples staged in VMEM as (D_up, 1): broadcast-mul + sublane sum
        pred_ref[...] = jnp.sum(sm * ds_ref[...], axis=0, keepdims=True)

    return kernel


def upsample_softmax_expectation(vol_flat, depth_samples, *, D, H, W, s,
                                 plane_w, plane_off):
    """vol_flat: [BN, D, P] cost volume; each depth slice's (H, W) plane is
    flattened into the last (lane) dim with row stride `plane_w` and offset
    `plane_off` (so pixel (h, w) is at lane h*plane_w + plane_off + w).

    Returns (vol [BN, D*s, HW_up], softmax [BN, D*s, HW_up], pred [BN, 1, HW_up]).
    """
    BN, D_in, P = vol_flat.shape
    assert D_in == D
    D_up, H_up, W_up = D * s, H * s, W * s
    HW_up = H_up * W_up
    # depth_samples must be the post-upsample depth bins (review correctness note)
    assert depth_samples.shape[0] == D_up, (
        "depth_samples must have length D * downsample_factor")

    AD_np = linear_interp_matrix(D, D_up)                      # (D_up, D)
    AH_np = linear_interp_matrix(H, H_up)                      # (H_up, H)
    AW_np = linear_interp_matrix(W, W_up)                      # (W_up, W)
    AD = jnp.asarray(AD_np)
    AWT = jnp.asarray(AW_np).T                                 # (W, W_up)
    ds_col = depth_samples.astype(jnp.float32).reshape(D_up, 1)

    # 2-tap (index, weight) pairs per output H row, baked at trace time.
    h_taps = []
    for q in range(H_up):
        nz = np.nonzero(AH_np[q])[0]
        if len(nz) == 1:
            h_taps.append((int(nz[0]), float(AH_np[q, nz[0]]), int(nz[0]), 0.0))
        else:
            h_taps.append((int(nz[0]), float(AH_np[q, nz[0]]),
                           int(nz[1]), float(AH_np[q, nz[1]])))

    # TODO(synk): for production shapes (e.g. 128x256x256) the per-item output
    # block exceeds VMEM; tile the H_up*W_up axis with halos in that regime.
    kernel = _make_fused_kernel(D, H, W, s, plane_w, plane_off, h_taps)
    vol, sm, pred = pl.pallas_call(
        kernel,
        grid=(BN,),
        in_specs=[
            pl.BlockSpec((None, D, P), lambda i: (i, 0, 0)),
            pl.BlockSpec((D_up, D), lambda i: (0, 0)),
            pl.BlockSpec((W, W_up), lambda i: (0, 0)),
            pl.BlockSpec((D_up, 1), lambda i: (0, 0)),
        ],
        out_specs=[
            pl.BlockSpec((None, D_up, HW_up), lambda i: (i, 0, 0)),
            pl.BlockSpec((None, D_up, HW_up), lambda i: (i, 0, 0)),
            pl.BlockSpec((None, 1, HW_up), lambda i: (i, 0, 0)),
        ],
        out_shape=(
            jax.ShapeDtypeStruct((BN, D_up, HW_up), jnp.float32),
            jax.ShapeDtypeStruct((BN, D_up, HW_up), jnp.float32),
            jax.ShapeDtypeStruct((BN, 1, HW_up), jnp.float32),
        ),
        scratch_shapes=[pltpu.VMEM((D, HW_up), jnp.float32)],
        compiler_params=pltpu.CompilerParams(
            dimension_semantics=("parallel",),
            vmem_limit_bytes=64 * 1024 * 1024),
    )(vol_flat, AD, AWT, ds_col)
    return vol, sm, pred


# ------------------------------------------------------------------
# DepthHead (forward only)
# ------------------------------------------------------------------
class DepthHeadPallas:
    def __init__(self, depth_cfg, in_channels=4, with_convs=True,
                 downsample_factor=4, num_views=2, key=None):
        self.in_channels = in_channels
        self.with_convs = with_convs
        self.downsample_factor = downsample_factor
        self.num_views = num_views
        self.min_depth = depth_cfg["min_depth"]
        self.max_depth = depth_cfg["max_depth"]
        if key is None:
            key = jax.random.PRNGKey(0)
        # nn.Conv3d(in_channels, 1, 3, 1, 1, bias=False): weight (1, C, 3, 3, 3)
        self.conv_weight = (0.1 * jax.random.normal(
            key, (1, in_channels, 3, 3, 3))).astype(jnp.float32)
        # TODO(synk): loss() (training-only; boolean masking + torch.distributed) not implemented.

    def forward(self, stereo_features, depth_samples):
        BN, C, D, H, W = stereo_features.shape
        B = BN // self.num_views
        s = self.downsample_factor
        D_up, H_up, W_up = D * s, H * s, W * s

        if self.with_convs:
            # conv result on padded-plane coords: pixel (h, w) at lane (h+1)*(W+2)+(w+1)
            vol_flat = conv3d_1out(stereo_features, self.conv_weight)
            plane_w, plane_off = W + 2, (W + 2) + 1
        else:
            vol_flat = stereo_features.reshape(BN, D, H * W)
            plane_w, plane_off = W, 0

        vol, sm, pred = upsample_softmax_expectation(
            vol_flat, depth_samples, D=D, H=H, W=W, s=s,
            plane_w=plane_w, plane_off=plane_off)

        vol = vol.reshape(B, self.num_views, D_up, H_up, W_up)
        sm = sm.reshape(B, self.num_views, D_up, H_up, W_up)
        pred = pred.reshape(B, self.num_views, H_up, W_up)
        return vol, sm, pred


if __name__ == "__main__":
    B, N, C, D, H, W = 2, 2, 4, 4, 4, 4
    s = 4
    D_up, H_up, W_up = D * s, H * s, W * s

    key = jax.random.PRNGKey(0)
    k_in, k_w = jax.random.split(key)
    x = jax.random.normal(k_in, (B * N, C, D, H, W), dtype=jnp.float32)

    depth_cfg = dict(min_depth=1.0, max_depth=10.0)
    head = DepthHeadPallas(depth_cfg, in_channels=C, with_convs=True,
                           downsample_factor=s, num_views=N, key=k_w)
    # depth_samples: bin centers over [min_depth, max_depth], length = upsampled D
    depth_samples = jnp.linspace(depth_cfg["min_depth"], depth_cfg["max_depth"],
                                 D_up, dtype=jnp.float32)

    vol, sm, preds = head.forward(x, depth_samples)
    jax.block_until_ready((vol, sm, preds))

    assert vol.shape == (B, N, D_up, H_up, W_up)
    assert sm.shape == (B, N, D_up, H_up, W_up)
    assert preds.shape == (B, N, H_up, W_up)

    # --- pure-JAX reference check ---
    ref_conv = jax.lax.conv_general_dilated(
        x, head.conv_weight, window_strides=(1, 1, 1),
        padding=((1, 1), (1, 1), (1, 1)),
        dimension_numbers=("NCDHW", "OIDHW", "NCDHW"))
    ref_vol = ref_conv.reshape(B, N, D, H, W)
    AD = jnp.asarray(linear_interp_matrix(D, D_up))
    AH = jnp.asarray(linear_interp_matrix(H, H_up))
    AW = jnp.asarray(linear_interp_matrix(W, W_up))
    ref_up = jnp.einsum("pd,bndhw->bnphw", AD, ref_vol)
    ref_up = jnp.einsum("qh,bnphw->bnpqw", AH, ref_up)
    ref_up = jnp.einsum("rw,bnpqw->bnpqr", AW, ref_up)
    ref_sm = jax.nn.softmax(ref_up, axis=2)
    ref_pred = jnp.sum(ref_sm * depth_samples[None, None, :, None, None], axis=2)

    assert jnp.allclose(vol, ref_up, atol=1e-3, rtol=1e-3)
    assert jnp.allclose(sm, ref_sm, atol=1e-4, rtol=1e-3)
    assert jnp.allclose(preds, ref_pred, atol=1e-3, rtol=1e-3)

    print("KERNEL_OK")
</pallas_src>

<mosaic_0001>
module attributes {stable_mosaic.version = 11 : i64} {
  func.func @kernel(%arg0: i32, %arg1: memref<1x4x6x50xf32, #tpu.memory_space<vmem>>, %arg2: memref<108xf32, #tpu.memory_space<smem>>, %arg3: memref<1x4x36xf32, #tpu.memory_space<vmem>>) attributes {dimension_semantics = [#tpu.dimension_semantics<parallel>], iteration_bounds = array<i64: 4>, scalar_prefetch = 0 : i64, scratch_operands = 0 : i64, tpu.core_type = #tpu.core_type<tc>, window_params = [{transform_indices = @transform_0, window_bounds = array<i64: 1, 4, 6, 50>}, {transform_indices = @transform_1, window_bounds = array<i64: 108>}, {transform_indices = @transform_2, window_bounds = array<i64: 1, 4, 36>}]} {
    %cst = arith.constant 0.000000e+00 : f32
    %0 = vector.broadcast %cst : f32 to vector<4x36xf32>
    %c0 = arith.constant 0 : index
    %1 = memref.load %arg2[%c0] : memref<108xf32, #tpu.memory_space<smem>>
    %c0_0 = arith.constant 0 : index
    %c0_1 = arith.constant 0 : index
    %c0_2 = arith.constant 0 : index
    %c0_3 = arith.constant 0 : index
    %2 = vector.load %arg1[%c0_0, %c0_1, %c0_2, %c0_3] : memref<1x4x6x50xf32, #tpu.memory_space<vmem>>, vector<1x1x4x36xf32>
    %3 = vector.shape_cast %2 : vector<1x1x4x36xf32> to vector<4x36xf32>
    %4 = vector.broadcast %1 : f32 to vector<4x36xf32>
    %5 = arith.mulf %4, %3 : vector<4x36xf32>
    %6 = arith.addf %0, %5 : vector<4x36xf32>
    %c9 = arith.constant 9 : index
    %7 = memref.load %arg2[%c9] : memref<108xf32, #tpu.memory_space<smem>>
    %c0_4 = arith.constant 0 : index
    %c0_5 = arith.constant 0 : index
    %c1 = arith.constant 1 : index
    %c0_6 = arith.constant 0 : index
    %8 = vector.load %arg1[%c0_4, %c0_5, %c1, %c0_6] : memref<1x4x6x50xf32, #tpu.memory_space<vmem>>, vector<1x1x4x36xf32>
    %9 = vector.shape_cast %8 : vector<1x1x4x36xf32> to vector<4x36xf32>
    %10 = vector.broadcast %7 : f32 to vector<4x36xf32>
    %11 = arith.mulf %10, %9 : vector<4x36xf32>
    %12 = arith.addf %6, %11 : vector<4x36xf32>
    %c18 = arith.constant 18 : index
    %13 = memref.load %arg2[%c18] : memref<108xf32, #tpu.memory_space<smem>>
    %c0_7 = arith.constant 0 : index
    %c0_8 = arith.constant 0 : index
    %c2 = arith.constant 2 : index
    %c0_9 = arith.constant 0 : index
    %14 = vector.load %arg1[%c0_7, %c0_8, %c2, %c0_9] : memref<1x4x6x50xf32, #tpu.memory_space<vmem>>, vector<1x1x4x36xf32>
    %15 = vector.shape_cast %14 : vector<1x1x4x36xf32> to vector<4x36xf32>
    %16 = vector.broadcast %13 : f32 to vector<4x36xf32>
    %17 = arith.mulf %16, %15 : vector<4x36xf32>
    %18 = arith.addf %12, %17 : vector<4x36xf32>
    %c27 = arith.constant 27 : index
    %19 = memref.load %arg2[%c27] : memref<108xf32, #tpu.memory_space<smem>>
    %c0_10 = arith.constant 0 : index
    %c1_11 = arith.constant 1 : index
    %c0_12 = arith.constant 0 : index
    %c0_13 = arith.constant 0 : index
    %20 = vector.load %arg1[%c0_10, %c1_11, %c0_12, %c0_13] : memref<1x4x6x50xf32, #tpu.memory_space<vmem>>, vector<1x1x4x36xf32>
    %21 = vector.shape_cast %20 : vector<1x1x4x36xf32> to vector<4x36xf32>
    %22 = vector.broadcast %19 : f32 to vector<4x36xf32>
    %23 = arith.mulf %22, %21 : vector<4x36xf32>
    %24 = arith.addf %18, %23 : vector<4x36xf32>
    %c36 = arith.constant 36 : index
    %25 = memref.load %arg2[%c36] : memref<108xf32, #tpu.memory_space<smem>>
    %c0_14 = arith.constant 0 : index
    %c1_15 = arith.constant 1 : index
    %c1_16 = arith.constant 1 : index
    %c0_17 = arith.constant 0 : index
    %26 = vector.load %arg1[%c0_14, %c1_15, %c1_16, %c0_17] : memref<1x4x6x50xf32, #tpu.memory_space<vmem>>, vector<1x1x4x36xf32>
    %27 = vector.shape_cast %26 : vector<1x1x4x36xf32> to vector<4x36xf32>
    %28 = vector.broadcast %25 : f32 to vector<4x36xf32>
    %29 = arith.mulf %28, %27 : vector<4x36xf32>
    %30 = arith.addf %24, %29 : vector<4x36xf32>
    %c45 = arith.constant 45 : index
    %31 = memref.load %arg2[%c45] : memref<108xf32, #tpu.memory_space<smem>>
    %c0_18 = arith.constant 0 : index
    %c1_19 = arith.constant 1 : index
    %c2_20 = arith.constant 2 : index
    %c0_21 = arith.constant 0 : index
    %32 = vector.load %arg1[%c0_18, %c1_19, %c2_20, %c0_21] : memref<1x4x6x50xf32, #tpu.memory_space<vmem>>, vector<1x1x4x36xf32>
    %33 = vector.shape_cast %32 : vector<1x1x4x36xf32> to vector<4x36xf32>
    %34 = vector.broadcast %31 : f32 to vector<4x36xf32>
    %35 = arith.mulf %34, %33 : vector<4x36xf32>
    %36 = arith.addf %30, %35 : vector<4x36xf32>
    %c54 = arith.constant 54 : index
    %37 = memref.load %arg2[%c54] : memref<108xf32, #tpu.memory_space<smem>>
    %c0_22 = arith.constant 0 : index
    %c2_23 = arith.constant 2 : index
    %c0_24 = arith.constant 0 : index
    %c0_25 = arith.constant 0 : index
    %38 = vector.load %arg1[%c0_22, %c2_23, %c0_24, %c0_25] : memref<1x4x6x50xf32, #tpu.memory_space<vmem>>, vector<1x1x4x36xf32>
    %39 = vector.shape_cast %38 : vector<1x1x4x36xf32> to vector<4x36xf32>
    %40 = vector.broadcast %37 : f32 to vector<4x36xf32>
    %41 = arith.mulf %40, %39 : vector<4x36xf32>
    %42 = arith.addf %36, %41 : vector<4x36xf32>
    %c63 = arith.constant 63 : index
    %43 = memref.load %arg2[%c63] : memref<108xf32, #tpu.memory_space<smem>>
    %c0_26 = arith.constant 0 : index
    %c2_27 = arith.constant 2 : index
    %c1_28 = arith.constant 1 : index
    %c0_29 = arith.constant 0 : index
    %44 = vector.load %arg1[%c0_26, %c2_27, %c1_28, %c0_29] : memref<1x4x6x50xf32, #tpu.memory_space<vmem>>, vector<1x1x4x36xf32>
    %45 = vector.shape_cast %44 : vector<1x1x4x36xf32> to vector<4x36xf32>
    %46 = vector.broadcast %43 : f32 to vector<4x36xf32>
    %47 = arith.mulf %46, %45 : vector<4x36xf32>
    %48 = arith.addf %42, %47 : vector<4x36xf32>
    %c72 = arith.constant 72 : index
    %49 = memref.load %arg2[%c72] : memref<108xf32, #tpu.memory_space<smem>>
    %c0_30 = arith.constant 0 : index
    %c2_31 = arith.constant 2 : index
    %c2_32 = arith.constant 2 : index
    %c0_33 = arith.constant 0 : index
    %50 = vector.load %arg1[%c0_30, %c2_31, %c2_32, %c0_33] : memref<1x4x6x50xf32, #tpu.memory_space<vmem>>, vector<1x1x4x36xf32>
    %51 = vector.shape_cast %50 : vector<1x1x4x36xf32> to vector<4x36xf32>
    %52 = vector.broadcast %49 : f32 to vector<4x36xf32>
    %53 = arith.mulf %52, %51 : vector<4x36xf32>
    %54 = arith.addf %48, %53 : vector<4x36xf32>
    %c81 = arith.constant 81 : index
    %55 = memref.load %arg2[%c81] : memref<108xf32, #tpu.memory_space<smem>>
    %c0_34 = arith.constant 0 : index
    %c3 = arith.constant 3 : index
    %c0_35 = arith.constant 0 : index
    %c0_36 = arith.constant 0 : index
    %56 = vector.load %arg1[%c0_34, %c3, %c0_35, %c0_36] : memref<1x4x6x50xf32, #tpu.memory_space<vmem>>, vector<1x1x4x36xf32>
    %57 = vector.shape_cast %56 : vector<1x1x4x36xf32> to vector<4x36xf32>
    %58 = vector.broadcast %55 : f32 to vector<4x36xf32>
    %59 = arith.mulf %58, %57 : vector<4x36xf32>
    %60 = arith.addf %54, %59 : vector<4x36xf32>
    %c90 = arith.constant 90 : index
    %61 = memref.load %arg2[%c90] : memref<108xf32, #tpu.memory_space<smem>>
    %c0_37 = arith.constant 0 : index
    %c3_38 = arith.constant 3 : index
    %c1_39 = arith.constant 1 : index
    %c0_40 = arith.constant 0 : index
    %62 = vector.load %arg1[%c0_37, %c3_38, %c1_39, %c0_40] : memref<1x4x6x50xf32, #tpu.memory_space<vmem>>, vector<1x1x4x36xf32>
    %63 = vector.shape_cast %62 : vector<1x1x4x36xf32> to vector<4x36xf32>
    %64 = vector.broadcast %61 : f32 to vector<4x36xf32>
    %65 = arith.mulf %64, %63 : vector<4x36xf32>
    %66 = arith.addf %60, %65 : vector<4x36xf32>
    %c99 = arith.constant 99 : index
    %67 = memref.load %arg2[%c99] : memref<108xf32, #tpu.memory_space<smem>>
    %c0_41 = arith.constant 0 : index
    %c3_42 = arith.constant 3 : index
    %c2_43 = arith.constant 2 : index
    %c0_44 = arith.constant 0 : index
    %68 = vector.load %arg1[%c0_41, %c3_42, %c2_43, %c0_44] : memref<1x4x6x50xf32, #tpu.memory_space<vmem>>, vector<1x1x4x36xf32>
    %69 = vector.shape_cast %68 : vector<1x1x4x36xf32> to vector<4x36xf32>
    %70 = vector.broadcast %67 : f32 to vector<4x36xf32>
    %71 = arith.mulf %70, %69 : vector<4x36xf32>
    %72 = arith.addf %66, %71 : vector<4x36xf32>
    %c1_45 = arith.constant 1 : index
    %73 = memref.load %arg2[%c1_45] : memref<108xf32, #tpu.memory_space<smem>>
    %c0_46 = arith.constant 0 : index
    %c0_47 = arith.constant 0 : index
    %c0_48 = arith.constant 0 : index
    %c1_49 = arith.constant 1 : index
    %74 = vector.load %arg1[%c0_46, %c0_47, %c0_48, %c1_49] : memref<1x4x6x50xf32, #tpu.memory_space<vmem>>, vector<1x1x4x36xf32>
    %75 = vector.shape_cast %74 : vector<1x1x4x36xf32> to vector<4x36xf32>
    %76 = vector.broadcast %73 : f32 to vector<4x36xf32>
    %77 = arith.mulf %76, %75 : vector<4x36xf32>
    %78 = arith.addf %72, %77 : vector<4x36xf32>
    %c10 = arith.constant 10 : index
    %79 = memref.load %arg2[%c10] : memref<108xf32, #tpu.memory_space<smem>>
    %c0_50 = arith.constant 0 : index
    %c0_51 = arith.constant 0 : index
    %c1_52 = arith.constant 1 : index
    %c1_53 = arith.constant 1 : index
    %80 = vector.load %arg1[%c0_50, %c0_51, %c1_52, %c1_53] : memref<1x4x6x50xf32, #tpu.memory_space<vmem>>, vector<1x1x4x36xf32>
    %81 = vector.shape_cast %80 : vector<1x1x4x36xf32> to vector<4x36xf32>
    %82 = vector.broadcast %79 : f32 to vector<4x36xf32>
    %83 = arith.mulf %82, %81 : vector<4x36xf32>
    %84 = arith.addf %78, %83 : vector<4x36xf32>
    %c19 = arith.constant 19 : index
    %85 = memref.load %arg2[%c19] : memref<108xf32, #tpu.memory_space<smem>>
    %c0_54 = arith.constant 0 : index
    %c0_55 = arith.constant 0 : index
    %c2_56 = arith.constant 2 : index
    %c1_57 = arith.constant 1 : index
    %86 = vector.load %arg1[%c0_54, %c0_55, %c2_56, %c1_57] : memref<1x4x6x50xf32, #tpu.memory_space<vmem>>, vector<1x1x4x36xf32>
    %87 = vector.shape_cast %86 : vector<1x1x4x36xf32> to vector<4x36xf32>
    %88 = vector.broadcast %85 : f32 to vector<4x36xf32>
    %89 = arith.mulf %88, %87 : vector<4x36xf32>
    %90 = arith.addf %84, %89 : vector<4x36xf32>
    %c28 = arith.constant 28 : index
    %91 = memref.load %arg2[%c28] : memref<108xf32, #tpu.memory_space<smem>>
    %c0_58 = arith.constant 0 : index
    %c1_59 = arith.constant 1 : index
    %c0_60 = arith.constant 0 : index
    %c1_61 = arith.constant 1 : index
    %92 = vector.load %arg1[%c0_58, %c1_59, %c0_60, %c1_61] : memref<1x4x6x50xf32, #tpu.memory_space<vmem>>, vector<1x1x4x36xf32>
    %93 = vector.shape_cast %92 : vector<1x1x4x36xf32> to vector<4x36xf32>
    %94 = vector.broadcast %91 : f32 to vector<4x36xf32>
    %95 = arith.mulf %94, %93 : vector<4x36xf32>
    %96 = arith.addf %90, %95 : vector<4x36xf32>
    %c37 = arith.constant 37 : index
    %97 = memref.load %arg2[%c37] : memref<108xf32, #tpu.memory_space<smem>>
    %c0_62 = arith.constant 0 : index
    %c1_63 = arith.constant 1 : index
    %c1_64 = arith.constant 1 : index
    %c1_65 = arith.constant 1 : index
    %98 = vector.load %arg1[%c0_62, %c1_63, %c1_64, %c1_65] : memref<1x4x6x50xf32, #tpu.memory_space<vmem>>, vector<1x1x4x36xf32>
    %99 = vector.shape_cast %98 : vector<1x1x4x36xf32> to vector<4x36xf32>
    %100 = vector.broadcast %97 : f32 to vector<4x36xf32>
    %101 = arith.mulf %100, %99 : vector<4x36xf32>
    %102 = arith.addf %96, %101 : vector<4x36xf32>
    %c46 = arith.constant 46 : index
    %103 = memref.load %arg2[%c46] : memref<108xf32, #tpu.memory_space<smem>>
    %c0_66 = arith.constant 0 : index
    %c1_67 = arith.constant 1 : index
    %c2_68 = arith.constant 2 : index
    %c1_69 = arith.constant 1 : index
    %104 = vector.load %arg1[%c0_66, %c1_67, %c2_68, %c1_69] : memref<1x4x6x50xf32, #tpu.memory_space<vmem>>, vector<1x1x4x36xf32>
    %105 = vector.shape_cast %104 : vector<1x1x4x36xf32> to vector<4x36xf32>
    %106 = vector.broadcast %103 : f32 to vector<4x36xf32>
    %107 = arith.mulf %106, %105 : vector<4x36xf32>
    %108 = arith.addf %102, %107 : vector<4x36xf32>
    %c55 = arith.constant 55 : index
    %109 = memref.load %arg2[%c55] : memref<108xf32, #tpu.memory_space<smem>>
    %c0_70 = arith.constant 0 : index
    %c2_71 = arith.constant 2 : index
    %c0_72 = arith.constant 0 : index
    %c1_73 = arith.constant 1 : index
    %110 = vector.load %arg1[%c0_70, %c2_71, %c0_72, %c1_73] : memref<1x4x6x50xf32, #tpu.memory_space<vmem>>, vector<1x1x4x36xf32>
    %111 = vector.shape_cast %110 : vector<1x1x4x36xf32> to vector<4x36xf32>
    %112 = vector.broadcast %109 : f32 to vector<4x36xf32>
    %113 = arith.mulf %112, %111 : vector<4x36xf32>
    %114 = arith.addf %108, %113 : vector<4x36xf32>
    %c64 = arith.constant 64 : index
    %115 = memref.load %arg2[%c64] : memref<108xf32, #tpu.memory_space<smem>>
    %c0_74 = arith.constant 0 : index
    %c2_75 = arith.constant 2 : index
    %c1_76 = arith.constant 1 : index
    %c1_77 = arith.constant 1 : index
    %116 = vector.load %arg1[%c0_74, %c2_75, %c1_76, %c1_77] : memref<1x4x6x50xf32, #tpu.memory_space<vmem>>, vector<1x1x4x36xf32>
    %117 = vector.shape_cast %116 : vector<1x1x4x36xf32> to vector<4x36xf32>
    %118 = vector.broadcast %115 : f32 to vector<4x36xf32>
    %119 = arith.mulf %118, %117 : vector<4x36xf32>
    %120 = arith.addf %114, %119 : vector<4x36xf32>
    %c73 = arith.constant 73 : index
    %121 = memref.load %arg2[%c73] : memref<108xf32, #tpu.memory_space<smem>>
    %c0_78 = arith.constant 0 : index
    %c2_79 = arith.constant 2 : index
    %c2_80 = arith.constant 2 : index
    %c1_81 = arith.constant 1 : index
    %122 = vector.load %arg1[%c0_78, %c2_79, %c2_80, %c1_81] : memref<1x4x6x50xf32, #tpu.memory_space<vmem>>, vector<1x1x4x36xf32>
    %123 = vector.shape_cast %122 : vector<1x1x4x36xf32> to vector<4x36xf32>
    %124 = vector.broadcast %121 : f32 to vector<4x36xf32>
    %125 = arith.mulf %124, %123 : vector<4x36xf32>
    %126 = arith.addf %120, %125 : vector<4x36xf32>
    %c82 = arith.constant 82 : index
    %127 = memref.load %arg2[%c82] : memref<108xf32, #tpu.memory_space<smem>>
    %c0_82 = arith.constant 0 : index
    %c3_83 = arith.constant 3 : index
    %c0_84 = arith.constant 0 : index
    %c1_85 = arith.constant 1 : index
    %128 = vector.load %arg1[%c0_82, %c3_83, %c0_84, %c1_85] : memref<1x4x6x50xf32, #tpu.memory_space<vmem>>, vector<1x1x4x36xf32>
    %129 = vector.shape_cast %128 : vector<1x1x4x36xf32> to vector<4x36xf32>
    %130 = vector.broadcast %127 : f32 to vector<4x36xf32>
    %131 = arith.mulf %130, %129 : vector<4x36xf32>
    %132 = arith.addf %126, %131 : vector<4x36xf32>
    %c91 = arith.constant 91 : index
    %133 = memref.load %arg2[%c91] : memref<108xf32, #tpu.memory_space<smem>>
    %c0_86 = arith.constant 0 : index
    %c3_87 = arith.constant 3 : index
    %c1_88 = arith.constant 1 : index
    %c1_89 = arith.constant 1 : index
    %134 = vector.load %arg1[%c0_86, %c3_87, %c1_88, %c1_89] : memref<1x4x6x50xf32, #tpu.memory_space<vmem>>, vector<1x1x4x36xf32>
    %135 = vector.shape_cast %134 : vector<1x1x4x36xf32> to vector<4x36xf32>
    %136 = vector.broadcast %133 : f32 to vector<4x36xf32>
    %137 = arith.mulf %136, %135 : vector<4x36xf32>
    %138 = arith.addf %132, %137 : vector<4x36xf32>
    %c100 = arith.constant 100 : index
    %139 = memref.load %arg2[%c100] : memref<108xf32, #tpu.memory_space<smem>>
    %c0_90 = arith.constant 0 : index
    %c3_91 = arith.constant 3 : index
    %c2_92 = arith.constant 2 : index
    %c1_93 = arith.constant 1 : index
    %140 = vector.load %arg1[%c0_90, %c3_91, %c2_92, %c1_93] : memref<1x4x6x50xf32, #tpu.memory_space<vmem>>, vector<1x1x4x36xf32>
    %141 = vector.shape_cast %140 : vector<1x1x4x36xf32> to vector<4x36xf32>
    %142 = vector.broadcast %139 : f32 to vector<4x36xf32>
    %143 = arith.mulf %142, %141 : vector<4x36xf32>
    %144 = arith.addf %138, %143 : vector<4x36xf32>
    %c2_94 = arith.constant 2 : index
    %145 = memref.load %arg2[%c2_94] : memref<108xf32, #tpu.memory_space<smem>>
    %c0_95 = arith.constant 0 : index
    %c0_96 = arith.constant 0 : index
    %c0_97 = arith.constant 0 : index
    %c2_98 = arith.constant 2 : index
    %146 = vector.load %arg1[%c0_95, %c0_96, %c0_97, %c2_98] : memref<1x4x6x50xf32, #tpu.memory_space<vmem>>, vector<1x1x4x36xf32>
    %147 = vector.shape_cast %146 : vector<1x1x4x36xf32> to vector<4x36xf32>
    %148 = vector.broadcast %145 : f32 to vector<4x36xf32>
    %149 = arith.mulf %148, %147 : vector<4x36xf32>
    %150 = arith.addf %144, %149 : vector<4x36xf32>
    %c11 = arith.constant 11 : index
    %151 = memref.load %arg2[%c11] : memref<108xf32, #tpu.memory_space<smem>>
    %c0_99 = arith.constant 0 : index
    %c0_100 = arith.constant 0 : index
    %c1_101 = arith.constant 1 : index
    %c2_102 = arith.constant 2 : index
    %152 = vector.load %arg1[%c0_99, %c0_100, %c1_101, %c2_102] : memref<1x4x6x50xf32, #tpu.memory_space<vmem>>, vector<1x1x4x36xf32>
    %153 = vector.shape_cast %152 : vector<1x1x4x36xf32> to vector<4x36xf32>
    %154 = vector.broadcast %151 : f32 to vector<4x36xf32>
    %155 = arith.mulf %154, %153 : vector<4x36xf32>
    %156 = arith.addf %150, %155 : vector<4x36xf32>
    %c20 = arith.constant 20 : index
    %157 = memref.load %arg2[%c20] : memref<108xf32, #tpu.memory_space<smem>>
    %c0_103 = arith.constant 0 : index
    %c0_104 = arith.constant 0 : index
    %c2_105 = arith.constant 2 : index
    %c2_106 = arith.constant 2 : index
    %158 = vector.load %arg1[%c0_103, %c0_104, %c2_105, %c2_106] : memref<1x4x6x50xf32, #tpu.memory_space<vmem>>, vector<1x1x4x36xf32>
    %159 = vector.shape_cast %158 : vector<1x1x4x36xf32> to vector<4x36xf32>
    %160 = vector.broadcast %157 : f32 to vector<4x36xf32>
    %161 = arith.mulf %160, %159 : vector<4x36xf32>
    %162 = arith.addf %156, %161 : vector<4x36xf32>
    %c29 = arith.constant 29 : index
    %163 = memref.load %arg2[%c29] : memref<108xf32, #tpu.memory_space<smem>>
    %c0_107 = arith.constant 0 : index
    %c1_108 = arith.constant 1 : index
    %c0_109 = arith.constant 0 : index
    %c2_110 = arith.constant 2 : index
    %164 = vector.load %arg1[%c0_107, %c1_108, %c0_109, %c2_110] : memref<1x4x6x50xf32, #tpu.memory_space<vmem>>, vector<1x1x4x36xf32>
    %165 = vector.shape_cast %164 : vector<1x1x4x36xf32> to vector<4x36xf32>
    %166 = vector.broadcast %163 : f32 to vector<4x36xf32>
    %167 = arith.mulf %166, %165 : vector<4x36xf32>
    %168 = arith.addf %162, %167 : vector<4x36xf32>
    %c38 = arith.constant 38 : index
    %169 = memref.load %arg2[%c38] : memref<108xf32, #tpu.memory_space<smem>>
    %c0_111 = arith.constant 0 : index
    %c1_112 = arith.constant 1 : index
    %c1_113 = arith.constant 1 : index
    %c2_114 = arith.constant 2 : index
    %170 = vector.load %arg1[%c0_111, %c1_112, %c1_113, %c2_114] : memref<1x4x6x50xf32, #tpu.memory_space<vmem>>, vector<1x1x4x36xf32>
    %171 = vector.shape_cast %170 : vector<1x1x4x36xf32> to vector<4x36xf32>
    %172 = vector.broadcast %169 : f32 to vector<4x36xf32>
    %173 = arith.mulf %172, %171 : vector<4x36xf32>
    %174 = arith.addf %168, %173 : vector<4x36xf32>
    %c47 = arith.constant 47 : index
    %175 = memref.load %arg2[%c47] : memref<108xf32, #tpu.memory_space<smem>>
    %c0_115 = arith.constant 0 : index
    %c1_116 = arith.constant 1 : index
    %c2_117 = arith.constant 2 : index
    %c2_118 = arith.constant 2 : index
    %176 = vector.load %arg1[%c0_115, %c1_116, %c2_117, %c2_118] : memref<1x4x6x50xf32, #tpu.memory_space<vmem>>, vector<1x1x4x36xf32>
    %177 = vector.shape_cast %176 : vector<1x1x4x36xf32> to vector<4x36xf32>
    %178 = vector.broadcast %175 : f32 to vector<4x36xf32>
    %179 = arith.mulf %178, %177 : vector<4x36xf32>
    %180 = arith.addf %174, %179 : vector<4x36xf32>
    %c56 = arith.constant 56 : index
    %181 = memref.load %arg2[%c56] : memref<108xf32, #tpu.memory_space<smem>>
    %c0_119 = arith.constant 0 : index
    %c2_120 = arith.constant 2 : index
    %c0_121 = arith.constant 0 : index
    %c2_122 = arith.constant 2 : index
    %182 = vector.load %arg1[%c0_119, %c2_120, %c0_121, %c2_122] : memref<1x4x6x50xf32, #tpu.memory_space<vmem>>, vector<1x1x4x36xf32>
    %183 = vector.shape_cast %182 : vector<1x1x4x36xf32> to vector<4x36xf32>
    %184 = vector.broadcast %181 : f32 to vector<4x36xf32>
    %185 = arith.mulf %184, %183 : vector<4x36xf32>
    %186 = arith.addf %180, %185 : vector<4x36xf32>
    %c65 = arith.constant 65 : index
    %187 = memref.load %arg2[%c65] : memref<108xf32, #tpu.memory_space<smem>>
    %c0_123 = arith.constant 0 : index
    %c2_124 = arith.constant 2 : index
    %c1_125 = arith.constant 1 : index
    %c2_126 = arith.constant 2 : index
    %188 = vector.load %arg1[%c0_123, %c2_124, %c1_125, %c2_126] : memref<1x4x6x50xf32, #tpu.memory_space<vmem>>, vector<1x1x4x36xf32>
    %189 = vector.shape_cast %188 : vector<1x1x4x36xf32> to vector<4x36xf32>
    %190 = vector.broadcast %187 : f32 to vector<4x36xf32>
    %191 = arith.mulf %190, %189 : vector<4x36xf32>
    %192 = arith.addf %186, %191 : vector<4x36xf32>
    %c74 = arith.constant 74 : index
    %193 = memref.load %arg2[%c74] : memref<108xf32, #tpu.memory_space<smem>>
    %c0_127 = arith.constant 0 : index
    %c2_128 = arith.constant 2 : index
    %c2_129 = arith.constant 2 : index
    %c2_130 = arith.constant 2 : index
    %194 = vector.load %arg1[%c0_127, %c2_128, %c2_129, %c2_130] : memref<1x4x6x50xf32, #tpu.memory_space<vmem>>, vector<1x1x4x36xf32>
    %195 = vector.shape_cast %194 : vector<1x1x4x36xf32> to vector<4x36xf32>
    %196 = vector.broadcast %193 : f32 to vector<4x36xf32>
    %197 = arith.mulf %196, %195 : vector<4x36xf32>
    %198 = arith.addf %192, %197 : vector<4x36xf32>
    %c83 = arith.constant 83 : index
    %199 = memref.load %arg2[%c83] : memref<108xf32, #tpu.memory_space<smem>>
    %c0_131 = arith.constant 0 : index
    %c3_132 = arith.constant 3 : index
    %c0_133 = arith.constant 0 : index
    %c2_134 = arith.constant 2 : index
    %200 = vector.load %arg1[%c0_131, %c3_132, %c0_133, %c2_134] : memref<1x4x6x50xf32, #tpu.memory_space<vmem>>, vector<1x1x4x36xf32>
    %201 = vector.shape_cast %200 : vector<1x1x4x36xf32> to vector<4x36xf32>
    %202 = vector.broadcast %199 : f32 to vector<4x36xf32>
    %203 = arith.mulf %202, %201 : vector<4x36xf32>
    %204 = arith.addf %198, %203 : vector<4x36xf32>
    %c92 = arith.constant 92 : index
    %205 = memref.load %arg2[%c92] : memref<108xf32, #tpu.memory_space<smem>>
    %c0_135 = arith.constant 0 : index
    %c3_136 = arith.constant 3 : index
    %c1_137 = arith.constant 1 : index
    %c2_138 = arith.constant 2 : index
    %206 = vector.load %arg1[%c0_135, %c3_136, %c1_137, %c2_138] : memref<1x4x6x50xf32, #tpu.memory_space<vmem>>, vector<1x1x4x36xf32>
    %207 = vector.shape_cast %206 : vector<1x1x4x36xf32> to vector<4x36xf32>
    %208 = vector.broadcast %205 : f32 to vector<4x36xf32>
    %209 = arith.mulf %208, %207 : vector<4x36xf32>
    %210 = arith.addf %204, %209 : vector<4x36xf32>
    %c101 = arith.constant 101 : index
    %211 = memref.load %arg2[%c101] : memref<108xf32, #tpu.memory_space<smem>>
    %c0_139 = arith.constant 0 : index
    %c3_140 = arith.constant 3 : index
    %c2_141 = arith.constant 2 : index
    %c2_142 = arith.constant 2 : index
    %212 = vector.load %arg1[%c0_139, %c3_140, %c2_141, %c2_142] : memref<1x4x6x50xf32, #tpu.memory_space<vmem>>, vector<1x1x4x36xf32>
    %213 = vector.shape_cast %212 : vector<1x1x4x36xf32> to vector<4x36xf32>
    %214 = vector.broadcast %211 : f32 to vector<4x36xf32>
    %215 = arith.mulf %214, %213 : vector<4x36xf32>
    %216 = arith.addf %210, %215 : vector<4x36xf32>
    %c3_143 = arith.constant 3 : index
    %217 = memref.load %arg2[%c3_143] : memref<108xf32, #tpu.memory_space<smem>>
    %c0_144 = arith.constant 0 : index
    %c0_145 = arith.constant 0 : index
    %c0_146 = arith.constant 0 : index
    %c6 = arith.constant 6 : index
    %218 = vector.load %arg1[%c0_144, %c0_145, %c0_146, %c6] : memref<1x4x6x50xf32, #tpu.memory_space<vmem>>, vector<1x1x4x36xf32>
    %219 = vector.shape_cast %218 : vector<1x1x4x36xf32> to vector<4x36xf32>
    %220 = vector.broadcast %217 : f32 to vector<4x36xf32>
    %221 = arith.mulf %220, %219 : vector<4x36xf32>
    %222 = arith.addf %216, %221 : vector<4x36xf32>
    %c12 = arith.constant 12 : index
    %223 = memref.load %arg2[%c12] : memref<108xf32, #tpu.memory_space<smem>>
    %c0_147 = arith.constant 0 : index
    %c0_148 = arith.constant 0 : index
    %c1_149 = arith.constant 1 : index
    %c6_150 = arith.constant 6 : index
    %224 = vector.load %arg1[%c0_147, %c0_148, %c1_149, %c6_150] : memref<1x4x6x50xf32, #tpu.memory_space<vmem>>, vector<1x1x4x36xf32>
    %225 = vector.shape_cast %224 : vector<1x1x4x36xf32> to vector<4x36xf32>
    %226 = vector.broadcast %223 : f32 to vector<4x36xf32>
    %227 = arith.mulf %226, %225 : vector<4x36xf32>
    %228 = arith.addf %222, %227 : vector<4x36xf32>
    %c21 = arith.constant 21 : index
    %229 = memref.load %arg2[%c21] : memref<108xf32, #tpu.memory_space<smem>>
    %c0_151 = arith.constant 0 : index
    %c0_152 = arith.constant 0 : index
    %c2_153 = arith.constant 2 : index
    %c6_154 = arith.constant 6 : index
    %230 = vector.load %arg1[%c0_151, %c0_152, %c2_153, %c6_154] : memref<1x4x6x50xf32, #tpu.memory_space<vmem>>, vector<1x1x4x36xf32>
    %231 = vector.shape_cast %230 : vector<1x1x4x36xf32> to vector<4x36xf32>
    %232 = vector.broadcast %229 : f32 to vector<4x36xf32>
    %233 = arith.mulf %232, %231 : vector<4x36xf32>
    %234 = arith.addf %228, %233 : vector<4x36xf32>
    %c30 = arith.constant 30 : index
    %235 = memref.load %arg2[%c30] : memref<108xf32, #tpu.memory_space<smem>>
    %c0_155 = arith.constant 0 : index
    %c1_156 = arith.constant 1 : index
    %c0_157 = arith.constant 0 : index
    %c6_158 = arith.constant 6 : index
    %236 = vector.load %arg1[%c0_155, %c1_156, %c0_157, %c6_158] : memref<1x4x6x50xf32, #tpu.memory_space<vmem>>, vector<1x1x4x36xf32>
    %237 = vector.shape_cast %236 : vector<1x1x4x36xf32> to vector<4x36xf32>
    %238 = vector.broadcast %235 : f32 to vector<4x36xf32>
    %239 = arith.mulf %238, %237 : vector<4x36xf32>
    %240 = arith.addf %234, %239 : vector<4x36xf32>
    %c39 = arith.constant 39 : index
    %241 = memref.load %arg2[%c39] : memref<108xf32, #tpu.memory_space<smem>>
    %c0_159 = arith.constant 0 : index
    %c1_160 = arith.constant 1 : index
    %c1_161 = arith.constant 1 : index
    %c6_162 = arith.constant 6 : index
    %242 = vector.load %arg1[%c0_159, %c1_160, %c1_161, %c6_162] : memref<1x4x6x50xf32, #tpu.memory_space<vmem>>, vector<1x1x4x36xf32>
    %243 = vector.shape_cast %242 : vector<1x1x4x36xf32> to vector<4x36xf32>
    %244 = vector.broadcast %241 : f32 to vector<4x36xf32>
    %245 = arith.mulf %244, %243 : vector<4x36xf32>
    %246 = arith.addf %240, %245 : vector<4x36xf32>
    %c48 = arith.constant 48 : index
    %247 = memref.load %arg2[%c48] : memref<108xf32, #tpu.memory_space<smem>>
    %c0_163 = arith.constant 0 : index
    %c1_164 = arith.constant 1 : index
    %c2_165 = arith.constant 2 : index
    %c6_166 = arith.constant 6 : index
    %248 = vector.load %arg1[%c0_163, %c1_164, %c2_165, %c6_166] : memref<1x4x6x50xf32, #tpu.memory_space<vmem>>, vector<1x1x4x36xf32>
    %249 = vector.shape_cast %248 : vector<1x1x4x36xf32> to vector<4x36xf32>
    %250 = vector.broadcast %247 : f32 to vector<4x36xf32>
    %251 = arith.mulf %250, %249 : vector<4x36xf32>
    %252 = arith.addf %246, %251 : vector<4x36xf32>
    %c57 = arith.constant 57 : index
    %253 = memref.load %arg2[%c57] : memref<108xf32, #tpu.memory_space<smem>>
    %c0_167 = arith.constant 0 : index
    %c2_168 = arith.constant 2 : index
    %c0_169 = arith.constant 0 : index
    %c6_170 = arith.constant 6 : index
    %254 = vector.load %arg1[%c0_167, %c2_168, %c0_169, %c6_170] : memref<1x4x6x50xf32, #tpu.memory_space<vmem>>, vector<1x1x4x36xf32>
    %255 = vector.shape_cast %254 : vector<1x1x4x36xf32> to vector<4x36xf32>
    %256 = vector.broadcast %253 : f32 to vector<4x36xf32>
    %257 = arith.mulf %256, %255 : vector<4x36xf32>
    %258 = arith.addf %252, %257 : vector<4x36xf32>
    %c66 = arith.constant 66 : index
    %259 = memref.load %arg2[%c66] : memref<108xf32, #tpu.memory_space<smem>>
    %c0_171 = arith.constant 0 : index
    %c2_172 = arith.constant 2 : index
    %c1_173 = arith.constant 1 : index
    %c6_174 = arith.constant 6 : index
    %260 = vector.load %arg1[%c0_171, %c2_172, %c1_173, %c6_174] : memref<1x4x6x50xf32, #tpu.memory_space<vmem>>, vector<1x1x4x36xf32>
    %261 = vector.shape_cast %260 : vector<1x1x4x36xf32> to vector<4x36xf32>
    %262 = vector.broadcast %259 : f32 to vector<4x36xf32>
    %263 = arith.mulf %262, %261 : vector<4x36xf32>
    %264 = arith.addf %258, %263 : vector<4x36xf32>
    %c75 = arith.constant 75 : index
    %265 = memref.load %arg2[%c75] : memref<108xf32, #tpu.memory_space<smem>>
    %c0_175 = arith.constant 0 : index
    %c2_176 = arith.constant 2 : index
    %c2_177 = arith.constant 2 : index
    %c6_178 = arith.constant 6 : index
    %266 = vector.load %arg1[%c0_175, %c2_176, %c2_177, %c6_178] : memref<1x4x6x50xf32, #tpu.memory_space<vmem>>, vector<1x1x4x36xf32>
    %267 = vector.shape_cast %266 : vector<1x1x4x36xf32> to vector<4x36xf32>
    %268 = vector.broadcast %265 : f32 to vector<4x36xf32>
    %269 = arith.mulf %268, %267 : vector<4x36xf32>
    %270 = arith.addf %264, %269 : vector<4x36xf32>
    %c84 = arith.constant 84 : index
    %271 = memref.load %arg2[%c84] : memref<108xf32, #tpu.memory_space<smem>>
    %c0_179 = arith.constant 0 : index
    %c3_180 = arith.constant 3 : index
    %c0_181 = arith.constant 0 : index
    %c6_182 = arith.constant 6 : index
    %272 = vector.load %arg1[%c0_179, %c3_180, %c0_181, %c6_182] : memref<1x4x6x50xf32, #tpu.memory_space<vmem>>, vector<1x1x4x36xf32>
    %273 = vector.shape_cast %272 : vector<1x1x4x36xf32> to vector<4x36xf32>
    %274 = vector.broadcast %271 : f32 to vector<4x36xf32>
    %275 = arith.mulf %274, %273 : vector<4x36xf32>
    %276 = arith.addf %270, %275 : vector<4x36xf32>
    %c93 = arith.constant 93 : index
    %277 = memref.load %arg2[%c93] : memref<108xf32, #tpu.memory_space<smem>>
    %c0_183 = arith.constant 0 : index
    %c3_184 = arith.constant 3 : index
    %c1_185 = arith.constant 1 : index
    %c6_186 = arith.constant 6 : index
    %278 = vector.load %arg1[%c0_183, %c3_184, %c1_185, %c6_186] : memref<1x4x6x50xf32, #tpu.memory_space<vmem>>, vector<1x1x4x36xf32>
    %279 = vector.shape_cast %278 : vector<1x1x4x36xf32> to vector<4x36xf32>
    %280 = vector.broadcast %277 : f32 to vector<4x36xf32>
    %281 = arith.mulf %280, %279 : vector<4x36xf32>
    %282 = arith.addf %276, %281 : vector<4x36xf32>
    %c102 = arith.constant 102 : index
    %283 = memref.load %arg2[%c102] : memref<108xf32, #tpu.memory_space<smem>>
    %c0_187 = arith.constant 0 : index
    %c3_188 = arith.constant 3 : index
    %c2_189 = arith.constant 2 : index
    %c6_190 = arith.constant 6 : index
    %284 = vector.load %arg1[%c0_187, %c3_188, %c2_189, %c6_190] : memref<1x4x6x50xf32, #tpu.memory_space<vmem>>, vector<1x1x4x36xf32>
    %285 = vector.shape_cast %284 : vector<1x1x4x36xf32> to vector<4x36xf32>
    %286 = vector.broadcast %283 : f32 to vector<4x36xf32>
    %287 = arith.mulf %286, %285 : vector<4x36xf32>
    %288 = arith.addf %282, %287 : vector<4x36xf32>
    %c4 = arith.constant 4 : index
    %289 = memref.load %arg2[%c4] : memref<108xf32, #tpu.memory_space<smem>>
    %c0_191 = arith.constant 0 : index
    %c0_192 = arith.constant 0 : index
    %c0_193 = arith.constant 0 : index
    %c7 = arith.constant 7 : index
    %290 = vector.load %arg1[%c0_191, %c0_192, %c0_193, %c7] : memref<1x4x6x50xf32, #tpu.memory_space<vmem>>, vector<1x1x4x36xf32>
    %291 = vector.shape_cast %290 : vector<1x1x4x36xf32> to vector<4x36xf32>
    %292 = vector.broadcast %289 : f32 to vector<4x36xf32>
    %293 = arith.mulf %292, %291 : vector<4x36xf32>
    %294 = arith.addf %288, %293 : vector<4x36xf32>
    %c13 = arith.constant 13 : index
    %295 = memref.load %arg2[%c13] : memref<108xf32, #tpu.memory_space<smem>>
    %c0_194 = arith.constant 0 : index
    %c0_195 = arith.constant 0 : index
    %c1_196 = arith.constant 1 : index
    %c7_197 = arith.constant 7 : index
    %296 = vector.load %arg1[%c0_194, %c0_195, %c1_196, %c7_197] : memref<1x4x6x50xf32, #tpu.memory_space<vmem>>, vector<1x1x4x36xf32>
    %297 = vector.shape_cast %296 : vector<1x1x4x36xf32> to vector<4x36xf32>
    %298 = vector.broadcast %295 : f32 to vector<4x36xf32>
    %299 = arith.mulf %298, %297 : vector<4x36xf32>
    %300 = arith.addf %294, %299 : vector<4x36xf32>
    %c22 = arith.constant 22 : index
    %301 = memref.load %arg2[%c22] : memref<108xf32, #tpu.memory_space<smem>>
    %c0_198 = arith.constant 0 : index
    %c0_199 = arith.constant 0 : index
    %c2_200 = arith.constant 2 : index
    %c7_201 = arith.constant 7 : index
    %302 = vector.load %arg1[%c0_198, %c0_199, %c2_200, %c7_201] : memref<1x4x6x50xf32, #tpu.memory_space<vmem>>, vector<1x1x4x36xf32>
    %303 = vector.shape_cast %302 : vector<1x1x4x36xf32> to vector<4x36xf32>
    %304 = vector.broadcast %301 : f32 to vector<4x36xf32>
    %305 = arith.mulf %304, %303 : vector<4x36xf32>
    %306 = arith.addf %300, %305 : vector<4x36xf32>
    %c31 = arith.constant 31 : index
    %307 = memref.load %arg2[%c31] : memref<108xf32, #tpu.memory_space<smem>>
    %c0_202 = arith.constant 0 : index
    %c1_203 = arith.constant 1 : index
    %c0_204 = arith.constant 0 : index
    %c7_205 = arith.constant 7 : index
    %308 = vector.load %arg1[%c0_202, %c1_203, %c0_204, %c7_205] : memref<1x4x6x50xf32, #tpu.memory_space<vmem>>, vector<1x1x4x36xf32>
    %309 = vector.shape_cast %308 : vector<1x1x4x36xf32> to vector<4x36xf32>
    %310 = vector.broadcast %307 : f32 to vector<4x36xf32>
    %311 = arith.mulf %310, %309 : vector<4x36xf32>
    %312 = arith.addf %306, %311 : vector<4x36xf32>
    %c40 = arith.constant 40 : index
    %313 = memref.load %arg2[%c40] : memref<108xf32, #tpu.memory_space<smem>>
    %c0_206 = arith.constant 0 : index
    %c1_207 = arith.constant 1 : index
    %c1_208 = arith.constant 1 : index
    %c7_209 = arith.constant 7 : index
    %314 = vector.load %arg1[%c0_206, %c1_207, %c1_208, %c7_209] : memref<1x4x6x50xf32, #tpu.memory_space<vmem>>, vector<1x1x4x36xf32>
    %315 = vector.shape_cast %314 : vector<1x1x4x36xf32> to vector<4x36xf32>
    %316 = vector.broadcast %313 : f32 to vector<4x36xf32>
    %317 = arith.mulf %316, %315 : vector<4x36xf32>
    %318 = arith.addf %312, %317 : vector<4x36xf32>
    %c49 = arith.constant 49 : index
    %319 = memref.load %arg2[%c49] : memref<108xf32, #tpu.memory_space<smem>>
    %c0_210 = arith.constant 0 : index
    %c1_211 = arith.constant 1 : index
    %c2_212 = arith.constant 2 : index
    %c7_213 = arith.constant 7 : index
    %320 = vector.load %arg1[%c0_210, %c1_211, %c2_212, %c7_213] : memref<1x4x6x50xf32, #tpu.memory_space<vmem>>, vector<1x1x4x36xf32>
    %321 = vector.shape_cast %320 : vector<1x1x4x36xf32> to vector<4x36xf32>
    %322 = vector.broadcast %319 : f32 to vector<4x36xf32>
    %323 = arith.mulf %322, %321 : vector<4x36xf32>
    %324 = arith.addf %318, %323 : vector<4x36xf32>
    %c58 = arith.constant 58 : index
    %325 = memref.load %arg2[%c58] : memref<108xf32, #tpu.memory_space<smem>>
    %c0_214 = arith.constant 0 : index
    %c2_215 = arith.constant 2 : index
    %c0_216 = arith.constant 0 : index
    %c7_217 = arith.constant 7 : index
    %326 = vector.load %arg1[%c0_214, %c2_215, %c0_216, %c7_217] : memref<1x4x6x50xf32, #tpu.memory_space<vmem>>, vector<1x1x4x36xf32>
    %327 = vector.shape_cast %326 : vector<1x1x4x36xf32> to vector<4x36xf32>
    %328 = vector.broadcast %325 : f32 to vector<4x36xf32>
    %329 = arith.mulf %328, %327 : vector<4x36xf32>
    %330 = arith.addf %324, %329 : vector<4x36xf32>
    %c67 = arith.constant 67 : index
    %331 = memref.load %arg2[%c67] : memref<108xf32, #tpu.memory_space<smem>>
    %c0_218 = arith.constant 0 : index
    %c2_219 = arith.constant 2 : index
    %c1_220 = arith.constant 1 : index
    %c7_221 = arith.constant 7 : index
    %332 = vector.load %arg1[%c0_218, %c2_219, %c1_220, %c7_221] : memref<1x4x6x50xf32, #tpu.memory_space<vmem>>, vector<1x1x4x36xf32>
    %333 = vector.shape_cast %332 : vector<1x1x4x36xf32> to vector<4x36xf32>
    %334 = vector.broadcast %331 : f32 to vector<4x36xf32>
    %335 = arith.mulf %334, %333 : vector<4x36xf32>
    %336 = arith.addf %330, %335 : vector<4x36xf32>
    %c76 = arith.constant 76 : index
    %337 = memref.load %arg2[%c76] : memref<108xf32, #tpu.memory_space<smem>>
    %c0_222 = arith.constant 0 : index
    %c2_223 = arith.constant 2 : index
    %c2_224 = arith.constant 2 : index
    %c7_225 = arith.constant 7 : index
    %338 = vector.load %arg1[%c0_222, %c2_223, %c2_224, %c7_225] : memref<1x4x6x50xf32, #tpu.memory_space<vmem>>, vector<1x1x4x36xf32>
    %339 = vector.shape_cast %338 : vector<1x1x4x36xf32> to vector<4x36xf32>
    %340 = vector.broadcast %337 : f32 to vector<4x36xf32>
    %341 = arith.mulf %340, %339 : vector<4x36xf32>
    %342 = arith.addf %336, %341 : vector<4x36xf32>
    %c85 = arith.constant 85 : index
    %343 = memref.load %arg2[%c85] : memref<108xf32, #tpu.memory_space<smem>>
    %c0_226 = arith.constant 0 : index
    %c3_227 = arith.constant 3 : index
    %c0_228 = arith.constant 0 : index
    %c7_229 = arith.constant 7 : index
    %344 = vector.load %arg1[%c0_226, %c3_227, %c0_228, %c7_229] : memref<1x4x6x50xf32, #tpu.memory_space<vmem>>, vector<1x1x4x36xf32>
    %345 = vector.shape_cast %344 : vector<1x1x4x36xf32> to vector<4x36xf32>
    %346 = vector.broadcast %343 : f32 to vector<4x36xf32>
    %347 = arith.mulf %346, %345 : vector<4x36xf32>
    %348 = arith.addf %342, %347 : vector<4x36xf32>
    %c94 = arith.constant 94 : index
    %349 = memref.load %arg2[%c94] : memref<108xf32, #tpu.memory_space<smem>>
    %c0_230 = arith.constant 0 : index
    %c3_231 = arith.constant 3 : index
    %c1_232 = arith.constant 1 : index
    %c7_233 = arith.constant 7 : index
    %350 = vector.load %arg1[%c0_230, %c3_231, %c1_232, %c7_233] : memref<1x4x6x50xf32, #tpu.memory_space<vmem>>, vector<1x1x4x36xf32>
    %351 = vector.shape_cast %350 : vector<1x1x4x36xf32> to vector<4x36xf32>
    %352 = vector.broadcast %349 : f32 to vector<4x36xf32>
    %353 = arith.mulf %352, %351 : vector<4x36xf32>
    %354 = arith.addf %348, %353 : vector<4x36xf32>
    %c103 = arith.constant 103 : index
    %355 = memref.load %arg2[%c103] : memref<108xf32, #tpu.memory_space<smem>>
    %c0_234 = arith.constant 0 : index
    %c3_235 = arith.constant 3 : index
    %c2_236 = arith.constant 2 : index
    %c7_237 = arith.constant 7 : index
    %356 = vector.load %arg1[%c0_234, %c3_235, %c2_236, %c7_237] : memref<1x4x6x50xf32, #tpu.memory_space<vmem>>, vector<1x1x4x36xf32>
    %357 = vector.shape_cast %356 : vector<1x1x4x36xf32> to vector<4x36xf32>
    %358 = vector.broadcast %355 : f32 to vector<4x36xf32>
    %359 = arith.mulf %358, %357 : vector<4x36xf32>
    %360 = arith.addf %354, %359 : vector<4x36xf32>
    %c5 = arith.constant 5 : index
    %361 = memref.load %arg2[%c5] : memref<108xf32, #tpu.memory_space<smem>>
    %c0_238 = arith.constant 0 : index
    %c0_239 = arith.constant 0 : index
    %c0_240 = arith.constant 0 : index
    %c8 = arith.constant 8 : index
    %362 = vector.load %arg1[%c0_238, %c0_239, %c0_240, %c8] : memref<1x4x6x50xf32, #tpu.memory_space<vmem>>, vector<1x1x4x36xf32>
    %363 = vector.shape_cast %362 : vector<1x1x4x36xf32> to vector<4x36xf32>
    %364 = vector.broadcast %361 : f32 to vector<4x36xf32>
    %365 = arith.mulf %364, %363 : vector<4x36xf32>
    %366 = arith.addf %360, %365 : vector<4x36xf32>
    %c14 = arith.constant 14 : index
    %367 = memref.load %arg2[%c14] : memref<108xf32, #tpu.memory_space<smem>>
    %c0_241 = arith.constant 0 : index
    %c0_242 = arith.constant 0 : index
    %c1_243 = arith.constant 1 : index
    %c8_244 = arith.constant 8 : index
    %368 = vector.load %arg1[%c0_241, %c0_242, %c1_243, %c8_244] : memref<1x4x6x50xf32, #tpu.memory_space<vmem>>, vector<1x1x4x36xf32>
    %369 = vector.shape_cast %368 : vector<1x1x4x36xf32> to vector<4x36xf32>
    %370 = vector.broadcast %367 : f32 to vector<4x36xf32>
    %371 = arith.mulf %370, %369 : vector<4x36xf32>
    %372 = arith.addf %366, %371 : vector<4x36xf32>
    %c23 = arith.constant 23 : index
    %373 = memref.load %arg2[%c23] : memref<108xf32, #tpu.memory_space<smem>>
    %c0_245 = arith.constant 0 : index
    %c0_246 = arith.constant 0 : index
    %c2_247 = arith.constant 2 : index
    %c8_248 = arith.constant 8 : index
    %374 = vector.load %arg1[%c0_245, %c0_246, %c2_247, %c8_248] : memref<1x4x6x50xf32, #tpu.memory_space<vmem>>, vector<1x1x4x36xf32>
    %375 = vector.shape_cast %374 : vector<1x1x4x36xf32> to vector<4x36xf32>
    %376 = vector.broadcast %373 : f32 to vector<4x36xf32>
    %377 = arith.mulf %376, %375 : vector<4x36xf32>
    %378 = arith.addf %372, %377 : vector<4x36xf32>
    %c32 = arith.constant 32 : index
    %379 = memref.load %arg2[%c32] : memref<108xf32, #tpu.memory_space<smem>>
    %c0_249 = arith.constant 0 : index
    %c1_250 = arith.constant 1 : index
    %c0_251 = arith.constant 0 : index
    %c8_252 = arith.constant 8 : index
    %380 = vector.load %arg1[%c0_249, %c1_250, %c0_251, %c8_252] : memref<1x4x6x50xf32, #tpu.memory_space<vmem>>, vector<1x1x4x36xf32>
    %381 = vector.shape_cast %380 : vector<1x1x4x36xf32> to vector<4x36xf32>
    %382 = vector.broadcast %379 : f32 to vector<4x36xf32>
    %383 = arith.mulf %382, %381 : vector<4x36xf32>
    %384 = arith.addf %378, %383 : vector<4x36xf32>
    %c41 = arith.constant 41 : index
    %385 = memref.load %arg2[%c41] : memref<108xf32, #tpu.memory_space<smem>>
    %c0_253 = arith.constant 0 : index
    %c1_254 = arith.constant 1 : index
    %c1_255 = arith.constant 1 : index
    %c8_256 = arith.constant 8 : index
    %386 = vector.load %arg1[%c0_253, %c1_254, %c1_255, %c8_256] : memref<1x4x6x50xf32, #tpu.memory_space<vmem>>, vector<1x1x4x36xf32>
    %387 = vector.shape_cast %386 : vector<1x1x4x36xf32> to vector<4x36xf32>
    %388 = vector.broadcast %385 : f32 to vector<4x36xf32>
    %389 = arith.mulf %388, %387 : vector<4x36xf32>
    %390 = arith.addf %384, %389 : vector<4x36xf32>
    %c50 = arith.constant 50 : index
    %391 = memref.load %arg2[%c50] : memref<108xf32, #tpu.memory_space<smem>>
    %c0_257 = arith.constant 0 : index
    %c1_258 = arith.constant 1 : index
    %c2_259 = arith.constant 2 : index
    %c8_260 = arith.constant 8 : index
    %392 = vector.load %arg1[%c0_257, %c1_258, %c2_259, %c8_260] : memref<1x4x6x50xf32, #tpu.memory_space<vmem>>, vector<1x1x4x36xf32>
    %393 = vector.shape_cast %392 : vector<1x1x4x36xf32> to vector<4x36xf32>
    %394 = vector.broadcast %391 : f32 to vector<4x36xf32>
    %395 = arith.mulf %394, %393 : vector<4x36xf32>
    %396 = arith.addf %390, %395 : vector<4x36xf32>
    %c59 = arith.constant 59 : index
    %397 = memref.load %arg2[%c59] : memref<108xf32, #tpu.memory_space<smem>>
    %c0_261 = arith.constant 0 : index
    %c2_262 = arith.constant 2 : index
    %c0_263 = arith.constant 0 : index
    %c8_264 = arith.constant 8 : index
    %398 = vector.load %arg1[%c0_261, %c2_262, %c0_263, %c8_264] : memref<1x4x6x50xf32, #tpu.memory_space<vmem>>, vector<1x1x4x36xf32>
    %399 = vector.shape_cast %398 : vector<1x1x4x36xf32> to vector<4x36xf32>
    %400 = vector.broadcast %397 : f32 to vector<4x36xf32>
    %401 = arith.mulf %400, %399 : vector<4x36xf32>
    %402 = arith.addf %396, %401 : vector<4x36xf32>
    %c68 = arith.constant 68 : index
    %403 = memref.load %arg2[%c68] : memref<108xf32, #tpu.memory_space<smem>>
    %c0_265 = arith.constant 0 : index
    %c2_266 = arith.constant 2 : index
    %c1_267 = arith.constant 1 : index
    %c8_268 = arith.constant 8 : index
    %404 = vector.load %arg1[%c0_265, %c2_266, %c1_267, %c8_268] : memref<1x4x6x50xf32, #tpu.memory_space<vmem>>, vector<1x1x4x36xf32>
    %405 = vector.shape_cast %404 : vector<1x1x4x36xf32> to vector<4x36xf32>
    %406 = vector.broadcast %403 : f32 to vector<4x36xf32>
    %407 = arith.mulf %406, %405 : vector<4x36xf32>
    %408 = arith.addf %402, %407 : vector<4x36xf32>
    %c77 = arith.constant 77 : index
    %409 = memref.load %arg2[%c77] : memref<108xf32, #tpu.memory_space<smem>>
    %c0_269 = arith.constant 0 : index
    %c2_270 = arith.constant 2 : index
    %c2_271 = arith.constant 2 : index
    %c8_272 = arith.constant 8 : index
    %410 = vector.load %arg1[%c0_269, %c2_270, %c2_271, %c8_272] : memref<1x4x6x50xf32, #tpu.memory_space<vmem>>, vector<1x1x4x36xf32>
    %411 = vector.shape_cast %410 : vector<1x1x4x36xf32> to vector<4x36xf32>
    %412 = vector.broadcast %409 : f32 to vector<4x36xf32>
    %413 = arith.mulf %412, %411 : vector<4x36xf32>
    %414 = arith.addf %408, %413 : vector<4x36xf32>
    %c86 = arith.constant 86 : index
    %415 = memref.load %arg2[%c86] : memref<108xf32, #tpu.memory_space<smem>>
    %c0_273 = arith.constant 0 : index
    %c3_274 = arith.constant 3 : index
    %c0_275 = arith.constant 0 : index
    %c8_276 = arith.constant 8 : index
    %416 = vector.load %arg1[%c0_273, %c3_274, %c0_275, %c8_276] : memref<1x4x6x50xf32, #tpu.memory_space<vmem>>, vector<1x1x4x36xf32>
    %417 = vector.shape_cast %416 : vector<1x1x4x36xf32> to vector<4x36xf32>
    %418 = vector.broadcast %415 : f32 to vector<4x36xf32>
    %419 = arith.mulf %418, %417 : vector<4x36xf32>
    %420 = arith.addf %414, %419 : vector<4x36xf32>
    %c95 = arith.constant 95 : index
    %421 = memref.load %arg2[%c95] : memref<108xf32, #tpu.memory_space<smem>>
    %c0_277 = arith.constant 0 : index
    %c3_278 = arith.constant 3 : index
    %c1_279 = arith.constant 1 : index
    %c8_280 = arith.constant 8 : index
    %422 = vector.load %arg1[%c0_277, %c3_278, %c1_279, %c8_280] : memref<1x4x6x50xf32, #tpu.memory_space<vmem>>, vector<1x1x4x36xf32>
    %423 = vector.shape_cast %422 : vector<1x1x4x36xf32> to vector<4x36xf32>
    %424 = vector.broadcast %421 : f32 to vector<4x36xf32>
    %425 = arith.mulf %424, %423 : vector<4x36xf32>
    %426 = arith.addf %420, %425 : vector<4x36xf32>
    %c104 = arith.constant 104 : index
    %427 = memref.load %arg2[%c104] : memref<108xf32, #tpu.memory_space<smem>>
    %c0_281 = arith.constant 0 : index
    %c3_282 = arith.constant 3 : index
    %c2_283 = arith.constant 2 : index
    %c8_284 = arith.constant 8 : index
    %428 = vector.load %arg1[%c0_281, %c3_282, %c2_283, %c8_284] : memref<1x4x6x50xf32, #tpu.memory_space<vmem>>, vector<1x1x4x36xf32>
    %429 = vector.shape_cast %428 : vector<1x1x4x36xf32> to vector<4x36xf32>
    %430 = vector.broadcast %427 : f32 to vector<4x36xf32>
    %431 = arith.mulf %430, %429 : vector<4x36xf32>
    %432 = arith.addf %426, %431 : vector<4x36xf32>
    %c6_285 = arith.constant 6 : index
    %433 = memref.load %arg2[%c6_285] : memref<108xf32, #tpu.memory_space<smem>>
    %c0_286 = arith.constant 0 : index
    %c0_287 = arith.constant 0 : index
    %c0_288 = arith.constant 0 : index
    %c12_289 = arith.constant 12 : index
    %434 = vector.load %arg1[%c0_286, %c0_287, %c0_288, %c12_289] : memref<1x4x6x50xf32, #tpu.memory_space<vmem>>, vector<1x1x4x36xf32>
    %435 = vector.shape_cast %434 : vector<1x1x4x36xf32> to vector<4x36xf32>
    %436 = vector.broadcast %433 : f32 to vector<4x36xf32>
    %437 = arith.mulf %436, %435 : vector<4x36xf32>
    %438 = arith.addf %432, %437 : vector<4x36xf32>
    %c15 = arith.constant 15 : index
    %439 = memref.load %arg2[%c15] : memref<108xf32, #tpu.memory_space<smem>>
    %c0_290 = arith.constant 0 : index
    %c0_291 = arith.constant 0 : index
    %c1_292 = arith.constant 1 : index
    %c12_293 = arith.constant 12 : index
    %440 = vector.load %arg1[%c0_290, %c0_291, %c1_292, %c12_293] : memref<1x4x6x50xf32, #tpu.memory_space<vmem>>, vector<1x1x4x36xf32>
    %441 = vector.shape_cast %440 : vector<1x1x4x36xf32> to vector<4x36xf32>
    %442 = vector.broadcast %439 : f32 to vector<4x36xf32>
    %443 = arith.mulf %442, %441 : vector<4x36xf32>
    %444 = arith.addf %438, %443 : vector<4x36xf32>
    %c24 = arith.constant 24 : index
    %445 = memref.load %arg2[%c24] : memref<108xf32, #tpu.memory_space<smem>>
    %c0_294 = arith.constant 0 : index
    %c0_295 = arith.constant 0 : index
    %c2_296 = arith.constant 2 : index
    %c12_297 = arith.constant 12 : index
    %446 = vector.load %arg1[%c0_294, %c0_295, %c2_296, %c12_297] : memref<1x4x6x50xf32, #tpu.memory_space<vmem>>, vector<1x1x4x36xf32>
    %447 = vector.shape_cast %446 : vector<1x1x4x36xf32> to vector<4x36xf32>
    %448 = vector.broadcast %445 : f32 to vector<4x36xf32>
    %449 = arith.mulf %448, %447 : vector<4x36xf32>
    %450 = arith.addf %444, %449 : vector<4x36xf32>
    %c33 = arith.constant 33 : index
    %451 = memref.load %arg2[%c33] : memref<108xf32, #tpu.memory_space<smem>>
    %c0_298 = arith.constant 0 : index
    %c1_299 = arith.constant 1 : index
    %c0_300 = arith.constant 0 : index
    %c12_301 = arith.constant 12 : index
    %452 = vector.load %arg1[%c0_298, %c1_299, %c0_300, %c12_301] : memref<1x4x6x50xf32, #tpu.memory_space<vmem>>, vector<1x1x4x36xf32>
    %453 = vector.shape_cast %452 : vector<1x1x4x36xf32> to vector<4x36xf32>
    %454 = vector.broadcast %451 : f32 to vector<4x36xf32>
    %455 = arith.mulf %454, %453 : vector<4x36xf32>
    %456 = arith.addf %450, %455 : vector<4x36xf32>
    %c42 = arith.constant 42 : index
    %457 = memref.load %arg2[%c42] : memref<108xf32, #tpu.memory_space<smem>>
    %c0_302 = arith.constant 0 : index
    %c1_303 = arith.constant 1 : index
    %c1_304 = arith.constant 1 : index
    %c12_305 = arith.constant 12 : index
    %458 = vector.load %arg1[%c0_302, %c1_303, %c1_304, %c12_305] : memref<1x4x6x50xf32, #tpu.memory_space<vmem>>, vector<1x1x4x36xf32>
    %459 = vector.shape_cast %458 : vector<1x1x4x36xf32> to vector<4x36xf32>
    %460 = vector.broadcast %457 : f32 to vector<4x36xf32>
    %461 = arith.mulf %460, %459 : vector<4x36xf32>
    %462 = arith.addf %456, %461 : vector<4x36xf32>
    %c51 = arith.constant 51 : index
    %463 = memref.load %arg2[%c51] : memref<108xf32, #tpu.memory_space<smem>>
    %c0_306 = arith.constant 0 : index
    %c1_307 = arith.constant 1 : index
    %c2_308 = arith.constant 2 : index
    %c12_309 = arith.constant 12 : index
    %464 = vector.load %arg1[%c0_306, %c1_307, %c2_308, %c12_309] : memref<1x4x6x50xf32, #tpu.memory_space<vmem>>, vector<1x1x4x36xf32>
    %465 = vector.shape_cast %464 : vector<1x1x4x36xf32> to vector<4x36xf32>
    %466 = vector.broadcast %463 : f32 to vector<4x36xf32>
    %467 = arith.mulf %466, %465 : vector<4x36xf32>
    %468 = arith.addf %462, %467 : vector<4x36xf32>
    %c60 = arith.constant 60 : index
    %469 = memref.load %arg2[%c60] : memref<108xf32, #tpu.memory_space<smem>>
    %c0_310 = arith.constant 0 : index
    %c2_311 = arith.constant 2 : index
    %c0_312 = arith.constant 0 : index
    %c12_313 = arith.constant 12 : index
    %470 = vector.load %arg1[%c0_310, %c2_311, %c0_312, %c12_313] : memref<1x4x6x50xf32, #tpu.memory_space<vmem>>, vector<1x1x4x36xf32>
    %471 = vector.shape_cast %470 : vector<1x1x4x36xf32> to vector<4x36xf32>
    %472 = vector.broadcast %469 : f32 to vector<4x36xf32>
    %473 = arith.mulf %472, %471 : vector<4x36xf32>
    %474 = arith.addf %468, %473 : vector<4x36xf32>
    %c69 = arith.constant 69 : index
    %475 = memref.load %arg2[%c69] : memref<108xf32, #tpu.memory_space<smem>>
    %c0_314 = arith.constant 0 : index
    %c2_315 = arith.constant 2 : index
    %c1_316 = arith.constant 1 : index
    %c12_317 = arith.constant 12 : index
    %476 = vector.load %arg1[%c0_314, %c2_315, %c1_316, %c12_317] : memref<1x4x6x50xf32, #tpu.memory_space<vmem>>, vector<1x1x4x36xf32>
    %477 = vector.shape_cast %476 : vector<1x1x4x36xf32> to vector<4x36xf32>
    %478 = vector.broadcast %475 : f32 to vector<4x36xf32>
    %479 = arith.mulf %478, %477 : vector<4x36xf32>
    %480 = arith.addf %474, %479 : vector<4x36xf32>
    %c78 = arith.constant 78 : index
    %481 = memref.load %arg2[%c78] : memref<108xf32, #tpu.memory_space<smem>>
    %c0_318 = arith.constant 0 : index
    %c2_319 = arith.constant 2 : index
    %c2_320 = arith.constant 2 : index
    %c12_321 = arith.constant 12 : index
    %482 = vector.load %arg1[%c0_318, %c2_319, %c2_320, %c12_321] : memref<1x4x6x50xf32, #tpu.memory_space<vmem>>, vector<1x1x4x36xf32>
    %483 = vector.shape_cast %482 : vector<1x1x4x36xf32> to vector<4x36xf32>
    %484 = vector.broadcast %481 : f32 to vector<4x36xf32>
    %485 = arith.mulf %484, %483 : vector<4x36xf32>
    %486 = arith.addf %480, %485 : vector<4x36xf32>
    %c87 = arith.constant 87 : index
    %487 = memref.load %arg2[%c87] : memref<108xf32, #tpu.memory_space<smem>>
    %c0_322 = arith.constant 0 : index
    %c3_323 = arith.constant 3 : index
    %c0_324 = arith.constant 0 : index
    %c12_325 = arith.constant 12 : index
    %488 = vector.load %arg1[%c0_322, %c3_323, %c0_324, %c12_325] : memref<1x4x6x50xf32, #tpu.memory_space<vmem>>, vector<1x1x4x36xf32>
    %489 = vector.shape_cast %488 : vector<1x1x4x36xf32> to vector<4x36xf32>
    %490 = vector.broadcast %487 : f32 to vector<4x36xf32>
    %491 = arith.mulf %490, %489 : vector<4x36xf32>
    %492 = arith.addf %486, %491 : vector<4x36xf32>
    %c96 = arith.constant 96 : index
    %493 = memref.load %arg2[%c96] : memref<108xf32, #tpu.memory_space<smem>>
    %c0_326 = arith.constant 0 : index
    %c3_327 = arith.constant 3 : index
    %c1_328 = arith.constant 1 : index
    %c12_329 = arith.constant 12 : index
    %494 = vector.load %arg1[%c0_326, %c3_327, %c1_328, %c12_329] : memref<1x4x6x50xf32, #tpu.memory_space<vmem>>, vector<1x1x4x36xf32>
    %495 = vector.shape_cast %494 : vector<1x1x4x36xf32> to vector<4x36xf32>
    %496 = vector.broadcast %493 : f32 to vector<4x36xf32>
    %497 = arith.mulf %496, %495 : vector<4x36xf32>
    %498 = arith.addf %492, %497 : vector<4x36xf32>
    %c105 = arith.constant 105 : index
    %499 = memref.load %arg2[%c105] : memref<108xf32, #tpu.memory_space<smem>>
    %c0_330 = arith.constant 0 : index
    %c3_331 = arith.constant 3 : index
    %c2_332 = arith.constant 2 : index
    %c12_333 = arith.constant 12 : index
    %500 = vector.load %arg1[%c0_330, %c3_331, %c2_332, %c12_333] : memref<1x4x6x50xf32, #tpu.memory_space<vmem>>, vector<1x1x4x36xf32>
    %501 = vector.shape_cast %500 : vector<1x1x4x36xf32> to vector<4x36xf32>
    %502 = vector.broadcast %499 : f32 to vector<4x36xf32>
    %503 = arith.mulf %502, %501 : vector<4x36xf32>
    %504 = arith.addf %498, %503 : vector<4x36xf32>
    %c7_334 = arith.constant 7 : index
    %505 = memref.load %arg2[%c7_334] : memref<108xf32, #tpu.memory_space<smem>>
    %c0_335 = arith.constant 0 : index
    %c0_336 = arith.constant 0 : index
    %c0_337 = arith.constant 0 : index
    %c13_338 = arith.constant 13 : index
    %506 = vector.load %arg1[%c0_335, %c0_336, %c0_337, %c13_338] : memref<1x4x6x50xf32, #tpu.memory_space<vmem>>, vector<1x1x4x36xf32>
    %507 = vector.shape_cast %506 : vector<1x1x4x36xf32> to vector<4x36xf32>
    %508 = vector.broadcast %505 : f32 to vector<4x36xf32>
    %509 = arith.mulf %508, %507 : vector<4x36xf32>
    %510 = arith.addf %504, %509 : vector<4x36xf32>
    %c16 = arith.constant 16 : index
    %511 = memref.load %arg2[%c16] : memref<108xf32, #tpu.memory_space<smem>>
    %c0_339 = arith.constant 0 : index
    %c0_340 = arith.constant 0 : index
    %c1_341 = arith.constant 1 : index
    %c13_342 = arith.constant 13 : index
    %512 = vector.load %arg1[%c0_339, %c0_340, %c1_341, %c13_342] : memref<1x4x6x50xf32, #tpu.memory_space<vmem>>, vector<1x1x4x36xf32>
    %513 = vector.shape_cast %512 : vector<1x1x4x36xf32> to vector<4x36xf32>
    %514 = vector.broadcast %511 : f32 to vector<4x36xf32>
    %515 = arith.mulf %514, %513 : vector<4x36xf32>
    %516 = arith.addf %510, %515 : vector<4x36xf32>
    %c25 = arith.constant 25 : index
    %517 = memref.load %arg2[%c25] : memref<108xf32, #tpu.memory_space<smem>>
    %c0_343 = arith.constant 0 : index
    %c0_344 = arith.constant 0 : index
    %c2_345 = arith.constant 2 : index
    %c13_346 = arith.constant 13 : index
    %518 = vector.load %arg1[%c0_343, %c0_344, %c2_345, %c13_346] : memref<1x4x6x50xf32, #tpu.memory_space<vmem>>, vector<1x1x4x36xf32>
    %519 = vector.shape_cast %518 : vector<1x1x4x36xf32> to vector<4x36xf32>
    %520 = vector.broadcast %517 : f32 to vector<4x36xf32>
    %521 = arith.mulf %520, %519 : vector<4x36xf32>
    %522 = arith.addf %516, %521 : vector<4x36xf32>
    %c34 = arith.constant 34 : index
    %523 = memref.load %arg2[%c34] : memref<108xf32, #tpu.memory_space<smem>>
    %c0_347 = arith.constant 0 : index
    %c1_348 = arith.constant 1 : index
    %c0_349 = arith.constant 0 : index
    %c13_350 = arith.constant 13 : index
    %524 = vector.load %arg1[%c0_347, %c1_348, %c0_349, %c13_350] : memref<1x4x6x50xf32, #tpu.memory_space<vmem>>, vector<1x1x4x36xf32>
    %525 = vector.shape_cast %524 : vector<1x1x4x36xf32> to vector<4x36xf32>
    %526 = vector.broadcast %523 : f32 to vector<4x36xf32>
    %527 = arith.mulf %526, %525 : vector<4x36xf32>
    %528 = arith.addf %522, %527 : vector<4x36xf32>
    %c43 = arith.constant 43 : index
    %529 = memref.load %arg2[%c43] : memref<108xf32, #tpu.memory_space<smem>>
    %c0_351 = arith.constant 0 : index
    %c1_352 = arith.constant 1 : index
    %c1_353 = arith.constant 1 : index
    %c13_354 = arith.constant 13 : index
    %530 = vector.load %arg1[%c0_351, %c1_352, %c1_353, %c13_354] : memref<1x4x6x50xf32, #tpu.memory_space<vmem>>, vector<1x1x4x36xf32>
    %531 = vector.shape_cast %530 : vector<1x1x4x36xf32> to vector<4x36xf32>
    %532 = vector.broadcast %529 : f32 to vector<4x36xf32>
    %533 = arith.mulf %532, %531 : vector<4x36xf32>
    %534 = arith.addf %528, %533 : vector<4x36xf32>
    %c52 = arith.constant 52 : index
    %535 = memref.load %arg2[%c52] : memref<108xf32, #tpu.memory_space<smem>>
    %c0_355 = arith.constant 0 : index
    %c1_356 = arith.constant 1 : index
    %c2_357 = arith.constant 2 : index
    %c13_358 = arith.constant 13 : index
    %536 = vector.load %arg1[%c0_355, %c1_356, %c2_357, %c13_358] : memref<1x4x6x50xf32, #tpu.memory_space<vmem>>, vector<1x1x4x36xf32>
    %537 = vector.shape_cast %536 : vector<1x1x4x36xf32> to vector<4x36xf32>
    %538 = vector.broadcast %535 : f32 to vector<4x36xf32>
    %539 = arith.mulf %538, %537 : vector<4x36xf32>
    %540 = arith.addf %534, %539 : vector<4x36xf32>
    %c61 = arith.constant 61 : index
    %541 = memref.load %arg2[%c61] : memref<108xf32, #tpu.memory_space<smem>>
    %c0_359 = arith.constant 0 : index
    %c2_360 = arith.constant 2 : index
    %c0_361 = arith.constant 0 : index
    %c13_362 = arith.constant 13 : index
    %542 = vector.load %arg1[%c0_359, %c2_360, %c0_361, %c13_362] : memref<1x4x6x50xf32, #tpu.memory_space<vmem>>, vector<1x1x4x36xf32>
    %543 = vector.shape_cast %542 : vector<1x1x4x36xf32> to vector<4x36xf32>
    %544 = vector.broadcast %541 : f32 to vector<4x36xf32>
    %545 = arith.mulf %544, %543 : vector<4x36xf32>
    %546 = arith.addf %540, %545 : vector<4x36xf32>
    %c70 = arith.constant 70 : index
    %547 = memref.load %arg2[%c70] : memref<108xf32, #tpu.memory_space<smem>>
    %c0_363 = arith.constant 0 : index
    %c2_364 = arith.constant 2 : index
    %c1_365 = arith.constant 1 : index
    %c13_366 = arith.constant 13 : index
    %548 = vector.load %arg1[%c0_363, %c2_364, %c1_365, %c13_366] : memref<1x4x6x50xf32, #tpu.memory_space<vmem>>, vector<1x1x4x36xf32>
    %549 = vector.shape_cast %548 : vector<1x1x4x36xf32> to vector<4x36xf32>
    %550 = vector.broadcast %547 : f32 to vector<4x36xf32>
    %551 = arith.mulf %550, %549 : vector<4x36xf32>
    %552 = arith.addf %546, %551 : vector<4x36xf32>
    %c79 = arith.constant 79 : index
    %553 = memref.load %arg2[%c79] : memref<108xf32, #tpu.memory_space<smem>>
    %c0_367 = arith.constant 0 : index
    %c2_368 = arith.constant 2 : index
    %c2_369 = arith.constant 2 : index
    %c13_370 = arith.constant 13 : index
    %554 = vector.load %arg1[%c0_367, %c2_368, %c2_369, %c13_370] : memref<1x4x6x50xf32, #tpu.memory_space<vmem>>, vector<1x1x4x36xf32>
    %555 = vector.shape_cast %554 : vector<1x1x4x36xf32> to vector<4x36xf32>
    %556 = vector.broadcast %553 : f32 to vector<4x36xf32>
    %557 = arith.mulf %556, %555 : vector<4x36xf32>
    %558 = arith.addf %552, %557 : vector<4x36xf32>
    %c88 = arith.constant 88 : index
    %559 = memref.load %arg2[%c88] : memref<108xf32, #tpu.memory_space<smem>>
    %c0_371 = arith.constant 0 : index
    %c3_372 = arith.constant 3 : index
    %c0_373 = arith.constant 0 : index
    %c13_374 = arith.constant 13 : index
    %560 = vector.load %arg1[%c0_371, %c3_372, %c0_373, %c13_374] : memref<1x4x6x50xf32, #tpu.memory_space<vmem>>, vector<1x1x4x36xf32>
    %561 = vector.shape_cast %560 : vector<1x1x4x36xf32> to vector<4x36xf32>
    %562 = vector.broadcast %559 : f32 to vector<4x36xf32>
    %563 = arith.mulf %562, %561 : vector<4x36xf32>
    %564 = arith.addf %558, %563 : vector<4x36xf32>
    %c97 = arith.constant 97 : index
    %565 = memref.load %arg2[%c97] : memref<108xf32, #tpu.memory_space<smem>>
    %c0_375 = arith.constant 0 : index
    %c3_376 = arith.constant 3 : index
    %c1_377 = arith.constant 1 : index
    %c13_378 = arith.constant 13 : index
    %566 = vector.load %arg1[%c0_375, %c3_376, %c1_377, %c13_378] : memref<1x4x6x50xf32, #tpu.memory_space<vmem>>, vector<1x1x4x36xf32>
    %567 = vector.shape_cast %566 : vector<1x1x4x36xf32> to vector<4x36xf32>
    %568 = vector.broadcast %565 : f32 to vector<4x36xf32>
    %569 = arith.mulf %568, %567 : vector<4x36xf32>
    %570 = arith.addf %564, %569 : vector<4x36xf32>
    %c106 = arith.constant 106 : index
    %571 = memref.load %arg2[%c106] : memref<108xf32, #tpu.memory_space<smem>>
    %c0_379 = arith.constant 0 : index
    %c3_380 = arith.constant 3 : index
    %c2_381 = arith.constant 2 : index
    %c13_382 = arith.constant 13 : index
    %572 = vector.load %arg1[%c0_379, %c3_380, %c2_381, %c13_382] : memref<1x4x6x50xf32, #tpu.memory_space<vmem>>, vector<1x1x4x36xf32>
    %573 = vector.shape_cast %572 : vector<1x1x4x36xf32> to vector<4x36xf32>
    %574 = vector.broadcast %571 : f32 to vector<4x36xf32>
    %575 = arith.mulf %574, %573 : vector<4x36xf32>
    %576 = arith.addf %570, %575 : vector<4x36xf32>
    %c8_383 = arith.constant 8 : index
    %577 = memref.load %arg2[%c8_383] : memref<108xf32, #tpu.memory_space<smem>>
    %c0_384 = arith.constant 0 : index
    %c0_385 = arith.constant 0 : index
    %c0_386 = arith.constant 0 : index
    %c14_387 = arith.constant 14 : index
    %578 = vector.load %arg1[%c0_384, %c0_385, %c0_386, %c14_387] : memref<1x4x6x50xf32, #tpu.memory_space<vmem>>, vector<1x1x4x36xf32>
    %579 = vector.shape_cast %578 : vector<1x1x4x36xf32> to vector<4x36xf32>
    %580 = vector.broadcast %577 : f32 to vector<4x36xf32>
    %581 = arith.mulf %580, %579 : vector<4x36xf32>
    %582 = arith.addf %576, %581 : vector<4x36xf32>
    %c17 = arith.constant 17 : index
    %583 = memref.load %arg2[%c17] : memref<108xf32, #tpu.memory_space<smem>>
    %c0_388 = arith.constant 0 : index
    %c0_389 = arith.constant 0 : index
    %c1_390 = arith.constant 1 : index
    %c14_391 = arith.constant 14 : index
    %584 = vector.load %arg1[%c0_388, %c0_389, %c1_390, %c14_391] : memref<1x4x6x50xf32, #tpu.memory_space<vmem>>, vector<1x1x4x36xf32>
    %585 = vector.shape_cast %584 : vector<1x1x4x36xf32> to vector<4x36xf32>
    %586 = vector.broadcast %583 : f32 to vector<4x36xf32>
    %587 = arith.mulf %586, %585 : vector<4x36xf32>
    %588 = arith.addf %582, %587 : vector<4x36xf32>
    %c26 = arith.constant 26 : index
    %589 = memref.load %arg2[%c26] : memref<108xf32, #tpu.memory_space<smem>>
    %c0_392 = arith.constant 0 : index
    %c0_393 = arith.constant 0 : index
    %c2_394 = arith.constant 2 : index
    %c14_395 = arith.constant 14 : index
    %590 = vector.load %arg1[%c0_392, %c0_393, %c2_394, %c14_395] : memref<1x4x6x50xf32, #tpu.memory_space<vmem>>, vector<1x1x4x36xf32>
    %591 = vector.shape_cast %590 : vector<1x1x4x36xf32> to vector<4x36xf32>
    %592 = vector.broadcast %589 : f32 to vector<4x36xf32>
    %593 = arith.mulf %592, %591 : vector<4x36xf32>
    %594 = arith.addf %588, %593 : vector<4x36xf32>
    %c35 = arith.constant 35 : index
    %595 = memref.load %arg2[%c35] : memref<108xf32, #tpu.memory_space<smem>>
    %c0_396 = arith.constant 0 : index
    %c1_397 = arith.constant 1 : index
    %c0_398 = arith.constant 0 : index
    %c14_399 = arith.constant 14 : index
    %596 = vector.load %arg1[%c0_396, %c1_397, %c0_398, %c14_399] : memref<1x4x6x50xf32, #tpu.memory_space<vmem>>, vector<1x1x4x36xf32>
    %597 = vector.shape_cast %596 : vector<1x1x4x36xf32> to vector<4x36xf32>
    %598 = vector.broadcast %595 : f32 to vector<4x36xf32>
    %599 = arith.mulf %598, %597 : vector<4x36xf32>
    %600 = arith.addf %594, %599 : vector<4x36xf32>
    %c44 = arith.constant 44 : index
    %601 = memref.load %arg2[%c44] : memref<108xf32, #tpu.memory_space<smem>>
    %c0_400 = arith.constant 0 : index
    %c1_401 = arith.constant 1 : index
    %c1_402 = arith.constant 1 : index
    %c14_403 = arith.constant 14 : index
    %602 = vector.load %arg1[%c0_400, %c1_401, %c1_402, %c14_403] : memref<1x4x6x50xf32, #tpu.memory_space<vmem>>, vector<1x1x4x36xf32>
    %603 = vector.shape_cast %602 : vector<1x1x4x36xf32> to vector<4x36xf32>
    %604 = vector.broadcast %601 : f32 to vector<4x36xf32>
    %605 = arith.mulf %604, %603 : vector<4x36xf32>
    %606 = arith.addf %600, %605 : vector<4x36xf32>
    %c53 = arith.constant 53 : index
    %607 = memref.load %arg2[%c53] : memref<108xf32, #tpu.memory_space<smem>>
    %c0_404 = arith.constant 0 : index
    %c1_405 = arith.constant 1 : index
    %c2_406 = arith.constant 2 : index
    %c14_407 = arith.constant 14 : index
    %608 = vector.load %arg1[%c0_404, %c1_405, %c2_406, %c14_407] : memref<1x4x6x50xf32, #tpu.memory_space<vmem>>, vector<1x1x4x36xf32>
    %609 = vector.shape_cast %608 : vector<1x1x4x36xf32> to vector<4x36xf32>
    %610 = vector.broadcast %607 : f32 to vector<4x36xf32>
    %611 = arith.mulf %610, %609 : vector<4x36xf32>
    %612 = arith.addf %606, %611 : vector<4x36xf32>
    %c62 = arith.constant 62 : index
    %613 = memref.load %arg2[%c62] : memref<108xf32, #tpu.memory_space<smem>>
    %c0_408 = arith.constant 0 : index
    %c2_409 = arith.constant 2 : index
    %c0_410 = arith.constant 0 : index
    %c14_411 = arith.constant 14 : index
    %614 = vector.load %arg1[%c0_408, %c2_409, %c0_410, %c14_411] : memref<1x4x6x50xf32, #tpu.memory_space<vmem>>, vector<1x1x4x36xf32>
    %615 = vector.shape_cast %614 : vector<1x1x4x36xf32> to vector<4x36xf32>
    %616 = vector.broadcast %613 : f32 to vector<4x36xf32>
    %617 = arith.mulf %616, %615 : vector<4x36xf32>
    %618 = arith.addf %612, %617 : vector<4x36xf32>
    %c71 = arith.constant 71 : index
    %619 = memref.load %arg2[%c71] : memref<108xf32, #tpu.memory_space<smem>>
    %c0_412 = arith.constant 0 : index
    %c2_413 = arith.constant 2 : index
    %c1_414 = arith.constant 1 : index
    %c14_415 = arith.constant 14 : index
    %620 = vector.load %arg1[%c0_412, %c2_413, %c1_414, %c14_415] : memref<1x4x6x50xf32, #tpu.memory_space<vmem>>, vector<1x1x4x36xf32>
    %621 = vector.shape_cast %620 : vector<1x1x4x36xf32> to vector<4x36xf32>
    %622 = vector.broadcast %619 : f32 to vector<4x36xf32>
    %623 = arith.mulf %622, %621 : vector<4x36xf32>
    %624 = arith.addf %618, %623 : vector<4x36xf32>
    %c80 = arith.constant 80 : index
    %625 = memref.load %arg2[%c80] : memref<108xf32, #tpu.memory_space<smem>>
    %c0_416 = arith.constant 0 : index
    %c2_417 = arith.constant 2 : index
    %c2_418 = arith.constant 2 : index
    %c14_419 = arith.constant 14 : index
    %626 = vector.load %arg1[%c0_416, %c2_417, %c2_418, %c14_419] : memref<1x4x6x50xf32, #tpu.memory_space<vmem>>, vector<1x1x4x36xf32>
    %627 = vector.shape_cast %626 : vector<1x1x4x36xf32> to vector<4x36xf32>
    %628 = vector.broadcast %625 : f32 to vector<4x36xf32>
    %629 = arith.mulf %628, %627 : vector<4x36xf32>
    %630 = arith.addf %624, %629 : vector<4x36xf32>
    %c89 = arith.constant 89 : index
    %631 = memref.load %arg2[%c89] : memref<108xf32, #tpu.memory_space<smem>>
    %c0_420 = arith.constant 0 : index
    %c3_421 = arith.constant 3 : index
    %c0_422 = arith.constant 0 : index
    %c14_423 = arith.constant 14 : index
    %632 = vector.load %arg1[%c0_420, %c3_421, %c0_422, %c14_423] : memref<1x4x6x50xf32, #tpu.memory_space<vmem>>, vector<1x1x4x36xf32>
    %633 = vector.shape_cast %632 : vector<1x1x4x36xf32> to vector<4x36xf32>
    %634 = vector.broadcast %631 : f32 to vector<4x36xf32>
    %635 = arith.mulf %634, %633 : vector<4x36xf32>
    %636 = arith.addf %630, %635 : vector<4x36xf32>
    %c98 = arith.constant 98 : index
    %637 = memref.load %arg2[%c98] : memref<108xf32, #tpu.memory_space<smem>>
    %c0_424 = arith.constant 0 : index
    %c3_425 = arith.constant 3 : index
    %c1_426 = arith.constant 1 : index
    %c14_427 = arith.constant 14 : index
    %638 = vector.load %arg1[%c0_424, %c3_425, %c1_426, %c14_427] : memref<1x4x6x50xf32, #tpu.memory_space<vmem>>, vector<1x1x4x36xf32>
    %639 = vector.shape_cast %638 : vector<1x1x4x36xf32> to vector<4x36xf32>
    %640 = vector.broadcast %637 : f32 to vector<4x36xf32>
    %641 = arith.mulf %640, %639 : vector<4x36xf32>
    %642 = arith.addf %636, %641 : vector<4x36xf32>
    %c107 = arith.constant 107 : index
    %643 = memref.load %arg2[%c107] : memref<108xf32, #tpu.memory_space<smem>>
    %c0_428 = arith.constant 0 : index
    %c3_429 = arith.constant 3 : index
    %c2_430 = arith.constant 2 : index
    %c14_431 = arith.constant 14 : index
    %644 = vector.load %arg1[%c0_428, %c3_429, %c2_430, %c14_431] : memref<1x4x6x50xf32, #tpu.memory_space<vmem>>, vector<1x1x4x36xf32>
    %645 = vector.shape_cast %644 : vector<1x1x4x36xf32> to vector<4x36xf32>
    %646 = vector.broadcast %643 : f32 to vector<4x36xf32>
    %647 = arith.mulf %646, %645 : vector<4x36xf32>
    %648 = arith.addf %642, %647 : vector<4x36xf32>
    %c0_432 = arith.constant 0 : index
    %c0_433 = arith.constant 0 : index
    %c0_434 = arith.constant 0 : index
    %649 = vector.load %arg3[%c0_432, %c0_433, %c0_434] : memref<1x4x36xf32, #tpu.memory_space<vmem>>, vector<1x4x36xf32>
    %650 = vector.shape_cast %649 : vector<1x4x36xf32> to vector<4x36xf32>
    %651 = vector.shape_cast %648 : vector<4x36xf32> to vector<1x4x36xf32>
    tpu.vector_store %arg3[%c0_432, %c0_433, %c0_434], %651 {strides = array<i32>} : memref<1x4x36xf32, #tpu.memory_space<vmem>>, vector<1x4x36xf32>,
    return
  }
  func.func @transform_0(%arg0: i32) -> (i32, i32, i32, i32) {
    %c0_i32 = arith.constant 0 : i32
    %c0_i32_0 = arith.constant 0 : i32
    %c0_i32_1 = arith.constant 0 : i32
    %c0_i32_2 = arith.constant 0 : i32
    return %arg0, %c0_i32, %c0_i32_0, %c0_i32_1 : i32, i32, i32, i32
  }
  func.func @transform_1(%arg0: i32) -> i32 {
    %c0_i32 = arith.constant 0 : i32
    %c0_i32_0 = arith.constant 0 : i32
    return %c0_i32 : i32
  }
  func.func @transform_2(%arg0: i32) -> (i32, i32, i32) {
    %c0_i32 = arith.constant 0 : i32
    %c0_i32_0 = arith.constant 0 : i32
    %c0_i32_1 = arith.constant 0 : i32
    return %arg0, %c0_i32, %c0_i32_0 : i32, i32, i32
  }
}

</mosaic_0001>

<llo_original>
// kernel: tpu_custom_call.1
$region0: #{tpu_custom_call.1}
  #allocation0 [shape = 'u32[]', space=smem, size = 0x4, offset = 0x4, fixed_abs, tag = 'smem constant byte address 0x4 - core index']
  #allocation1 [shape = 'u32[144,128]{1,0:T(1,128)}', space=vmem, size = 0x12000, scoped, tag = 'internal scratch']
  %s0 = inlined_call_operand.vmem [shape: f32[4,4,6,50], index: 0, kind: input, shape index: {}]
  %s1 = inlined_call_operand.vmem [shape: f32[108], index: 1, kind: input, shape index: {}]
  %s2 = inlined_call_operand.hbm [shape: f32[4,4,36], index: 2, kind: output, shape index: {}]
  %s3 = sld [smem:[#allocation0]]
  $region45: #{tpu_custom_call.1} parent=0
    _
  %s5 = ssub.s32 1, %s3
  %s6 = scalar_select 0, %s5, %s3
  $region1: #{tpu_custom_call.1} parent=0
    #allocation2 [shape = 'u8[512]{0}', space=smem, size = 0x200, scoped, tag = 'input window, operand 1, single buffered']
    #allocation3 [shape = 's32[2]{0}', space=sflag, size = 0x8, scoped, tag = 'scoped memory for tpu_custom_call.1']
    #allocation4 [shape = 's32[2]{0}', space=sflag, size = 0x8, scoped, tag = 'scoped memory for tpu_custom_call.1']
    #allocation5 [shape = 'u8[4096]{0}', space=vmem, size = 0x1000, scoped, tag = 'output window, operand 0']
    %7 = vsyncpa [#allocation4], 0
    %8 = vsyncpa [#allocation3], 0
    %s9 = scalar_lea.sflag [#allocation3], 1
    %10 = vsyncpa %s9, 0
    loop: start=0, step=1, limit=6
    $region2: #{tpu_custom_call.1} parent=1 // loop_pre_header
      _
    $region3: #{tpu_custom_call.1} parent=1 // loop_header
      %s12 = sphi 0, %s16
      %p13 = scmp.ge.s32.totalorder %s12, 6
      %s22 = sphi 0, %s24
      %s25 = sphi 0, %s22
      %s26 = sphi 0, %s25
      %s42 = sphi 0, %s26
      %s46 = sphi 0, %s46
      %s48 = sphi 0, %s46
      %s49 = sphi 0, %s48
      %s63 = sphi 0, %s49
      %s69 = sphi 0, %s71
      %s72 = sphi 0, %s69
      %s73 = sphi 0, %s72
      %s89 = sphi 0, %s73
    $region4: #{tpu_custom_call.1} parent=1 // loop_header_branch
      %15 = sbr.rel (%p13) target = $region8
    $region5: #{tpu_custom_call.1} parent=1 // loop_body
      %s17 = ssub.s32 %s12, 1
      %s18 = ssub.s32 %s12, 2
      %s19 = sadd.s32 %s12, 1
      %s20 = ssub.s32 %s12, %s19
      %p21 = scmp.eq.s32.totalorder %s20, 0
      %s23 = sadd.s32 %s22, 1
      %s24 = scalar_select %p21, %s22, %s23
      %p27 = pneg %p21
      %p28 = scmp.eq.s32.totalorder %s12, 3
      %p29 = por %p27, %p28
      %p30 = scmp.ne.s32.totalorder %s22, %s25
      %p31 = scmp.eq.s32.totalorder %s12, 0
      %p32 = por %p30, %p31
      %p33 = scmp.ne.s32.totalorder %s22, %s25
      %p34 = scmp.eq.s32.totalorder %s17, 3
      %p35 = por %p33, %p34
      %p36 = scmp.ne.s32.totalorder %s25, %s26
      %p37 = scmp.eq.s32.totalorder %s17, 0
      %p38 = por %p36, %p37
      %p39 = scmp.ne.s32.totalorder %s25, %s26
      %p40 = scmp.eq.s32.totalorder %s18, 3
      %p41 = por %p39, %p40
      %p43 = scmp.ne.s32.totalorder %s26, %s42
      %p44 = scmp.eq.s32.totalorder %s18, 0
      %p45 = por %p43, %p44
      %s47 = sadd.s32 %s46, 1
      %p50 = scmp.eq.s32.totalorder %s12, 3
      %p51 = scmp.ne.s32.totalorder %s46, %s48
      %p52 = scmp.eq.s32.totalorder %s12, 0
      %p53 = por %p51, %p52
      %p54 = scmp.ne.s32.totalorder %s46, %s48
      %p55 = scmp.eq.s32.totalorder %s17, 3
      %p56 = por %p54, %p55
      %p57 = scmp.ne.s32.totalorder %s48, %s49
      %p58 = scmp.eq.s32.totalorder %s17, 0
      %p59 = por %p57, %p58
      %p60 = scmp.ne.s32.totalorder %s48, %s49
      %p61 = scmp.eq.s32.totalorder %s18, 3
      %p62 = por %p60, %p61
      %p64 = scmp.ne.s32.totalorder %s49, %s63
      %p65 = scmp.eq.s32.totalorder %s18, 0
      %p66 = por %p64, %p65
      %s67 = ssub.s32 %s12, %s19
      %p68 = scmp.eq.s32.totalorder %s67, 0
      %s70 = sadd.s32 %s69, 1
      %s71 = scalar_select %p68, %s69, %s70
      %p74 = pneg %p68
      %p75 = scmp.eq.s32.totalorder %s12, 3
      %p76 = por %p74, %p75
      %p77 = scmp.ne.s32.totalorder %s69, %s72
      %p78 = scmp.eq.s32.totalorder %s12, 0
      %p79 = por %p77, %p78
      %p80 = scmp.ne.s32.totalorder %s69, %s72
      %p81 = scmp.eq.s32.totalorder %s17, 3
      %p82 = por %p80, %p81
      %p83 = scmp.ne.s32.totalorder %s72, %s73
      %p84 = scmp.eq.s32.totalorder %s17, 0
      %p85 = por %p83, %p84
      %p86 = scmp.ne.s32.totalorder %s72, %s73
      %p87 = scmp.eq.s32.totalorder %s18, 3
      %p88 = por %p86, %p87
      %p90 = scmp.ne.s32.totalorder %s73, %s89
      %p91 = scmp.eq.s32.totalorder %s18, 0
      %p92 = por %p90, %p91
      %p93 = scmp.le.s32.totalorder 1, %s12
      %p94 = scmp.lt.s32.totalorder %s12, 5
      %p95 = pnand %p93, %p94
      %p96 = pneg %p95
      // Predicated region
      $region9: #{tpu_custom_call.1} parent=5 // pred_check
        _
      $region10: #{tpu_custom_call.1} parent=5 // pred_check_branch
        %98 = sbr.rel (%p95) target = $region12
      $region11: #{tpu_custom_call.1} parent=5 // pred_region
        %s99 = ssub.s32 %s12, 1
        // Predicated region
        $region13: #{tpu_custom_call.1} parent=11 // pred_check
          %p100 = pneg %p59
        $region14: #{tpu_custom_call.1} parent=11 // pred_check_branch
          %102 = sbr.rel (%p100) target = $region16
        $region15: #{tpu_custom_call.1} parent=11 // pred_region
          %s104 = ssub.s32 16, 16
          %105 = vsyncadd [#allocation4], %s104
          %s107 = sshll.u32 %s1, 4
          %s108 = int_to_ptr.vmem [resolvable:$true] %s107
          %110 = dma.vmem_to_smem %s108, 16, [#allocation2], [#allocation4]
        $region16: #{tpu_custom_call.1} parent=11 // pred_fallthru
          _
      $region12: #{tpu_custom_call.1} parent=5 // pred_fallthru
        _
      %p111 = scmp.lt.s32.totalorder %s12, 4
      // Predicated region
      $region17: #{tpu_custom_call.1} parent=5 // pred_check
        %p112 = pneg %p111
      $region18: #{tpu_custom_call.1} parent=5 // pred_check_branch
        %114 = sbr.rel (%p112) target = $region20
      $region19: #{tpu_custom_call.1} parent=5 // pred_region
        // Predicated region
        $region21: #{tpu_custom_call.1} parent=19 // pred_check
          %p115 = pneg %p32
        $region22: #{tpu_custom_call.1} parent=19 // pred_check_branch
          %117 = sbr.rel (%p115) target = $region24
        $region23: #{tpu_custom_call.1} parent=19 // pred_region
          %p118 = scmp.lt.s32.totalorder %s12, 3
          %s119 = scalar_select %p118, %s12, 3
          %s120 = smul.addr %s119, 4
          %s121 = smul.addr %s120, 8
          %s122 = scalar_lea.vmem %s0, %s121
        $region24: #{tpu_custom_call.1} parent=19 // pred_fallthru
          _
      $region20: #{tpu_custom_call.1} parent=5 // pred_fallthru
        _
      %p123 = scmp.le.s32.totalorder 1, %s12
      %p124 = scmp.lt.s32.totalorder %s12, 5
      %p125 = pnand %p123, %p124
      %p126 = pneg %p125
      // Predicated region
      $region25: #{tpu_custom_call.1} parent=5 // pred_check
        _
      $region26: #{tpu_custom_call.1} parent=5 // pred_check_branch
        %128 = sbr.rel (%p125) target = $region28
      $region27: #{tpu_custom_call.1} parent=5 // pred_region
        %s129 = ssub.s32 %s12, 1
        // Predicated region
        $region29: #{tpu_custom_call.1} parent=27 // pred_check
          %p130 = pneg %p59
        $region30: #{tpu_custom_call.1} parent=27 // pred_check_branch
          %132 = sbr.rel (%p130) target = $region32
        $region31: #{tpu_custom_call.1} parent=27 // pred_region
          %133 = dma.done [#allocation4], 16
        $region32: #{tpu_custom_call.1} parent=27 // pred_fallthru
          _
        %134 = sfence
        %p135 = scmp.lt.s32.totalorder %s17, 3
        %s136 = scalar_select %p135, %s17, 3
        %s137 = smul.addr %s136, 4
        %s138 = smul.addr %s137, 8
        %s139 = scalar_lea.vmem %s0, %s138
        %p140 = pneg %p38
        %p141 = pneg %p35
        %p142 = pneg %p59
        %p143 = pneg %p56
        %p144 = pneg %p85
        %p145 = pneg %p82
        %s146 = sand.u32 %s72, 1
        %s147 = scalar_lea.sflag [#allocation3], %s146
        %s148 = sand.u32 %s72, 1
        %s149 = smul.addr %s148, 4
        %s150 = scalar_lea.vmem [#allocation5], %s149
        %p151 = scmp.lt.s32.totalorder %s17, 3
        %s152 = scalar_select %p151, %s17, 3
        %s153 = smul.addr %s152, 4
        %s154 = smul.addr %s153, 8
        %s155 = scalar_lea.vmem %s0, %s154
        %s156 = sld [smem:[#allocation2]]
        %v157 = vld [vmem:[%s155] sm:$0xf]
        %v158 = vstv %s156
        %v159 = vmul.f32 %v158, %v157
        %v160 = vadd.f32 %v159, 0.0
        %s161 = sld [smem:[#allocation2 + $0x9]]
        %v162 = vld [vmem:[%s155 + $0x1] sm:$0xf]
        %v163 = vstv %s161
        %v164 = vmul.f32 %v163, %v162
        %v165 = vadd.f32 %v160, %v164
        %s166 = sld [smem:[#allocation2 + $0x12]]
        %v167 = vld [vmem:[%s155 + $0x2] sm:$0xf]
        %v168 = vstv %s166
        %v169 = vmul.f32 %v168, %v167
        %v170 = vadd.f32 %v165, %v169
        %s171 = sld [smem:[#allocation2 + $0x1b]]
        %s172 = scalar_lea.vmem %s155, 8
        %v173 = vld [vmem:[%s172] sm:$0xf]
        %v174 = vstv %s171
        %v175 = vmul.f32 %v174, %v173
        %v176 = vadd.f32 %v170, %v175
        %s177 = sld [smem:[#allocation2 + $0x24]]
        %v178 = vld [vmem:[%s172 + $0x1] sm:$0xf]
        %v179 = vstv %s177
        %v180 = vmul.f32 %v179, %v178
        %v181 = vadd.f32 %v176, %v180
        %s182 = sld [smem:[#allocation2 + $0x2d]]
        %v183 = vld [vmem:[%s172 + $0x2] sm:$0xf]
        %v184 = vstv %s182
        %v185 = vmul.f32 %v184, %v183
        %v186 = vadd.f32 %v181, %v185
        %s187 = sld [smem:[#allocation2 + $0x36]]
        %s188 = scalar_lea.vmem %s155, 16
        %v189 = vld [vmem:[%s188] sm:$0xf]
        %v190 = vstv %s187
        %v191 = vmul.f32 %v190, %v189
        %v192 = vadd.f32 %v186, %v191
        %s193 = sld [smem:[#allocation2 + $0x3f]]
        %v194 = vld [vmem:[%s188 + $0x1] sm:$0xf]
        %v195 = vstv %s193
        %v196 = vmul.f32 %v195, %v194
        %v197 = vadd.f32 %v192, %v196
        %s198 = sld [smem:[#allocation2 + $0x48]]
        %v199 = vld [vmem:[%s188 + $0x2] sm:$0xf]
        %v200 = vstv %s198
        %v201 = vmul.f32 %v200, %v199
        %v202 = vadd.f32 %v197, %v201
        %s203 = sld [smem:[#allocation2 + $0x51]]
        %s204 = scalar_lea.vmem %s155, 24
        %v205 = vld [vmem:[%s204] sm:$0xf]
        %v206 = vstv %s203
        %v207 = vmul.f32 %v206, %v205
        %v208 = vadd.f32 %v202, %v207
        %s209 = sld [smem:[#allocation2 + $0x5a]]
        %v210 = vld [vmem:[%s204 + $0x1] sm:$0xf]
        %v211 = vstv %s209
        %v212 = vmul.f32 %v211, %v210
        %v213 = vadd.f32 %v208, %v212
        %s214 = sld [smem:[#allocation2 + $0x63]]
        %v215 = vld [vmem:[%s204 + $0x2] sm:$0xf]
        %v216 = vstv %s214
        %v217 = vmul.f32 %v216, %v215
        %v218 = vadd.f32 %v213, %v217
        %s219 = sld [smem:[#allocation2 + $0x1]]
        %v220 = vstv %s219
        %v221 = vmul.f32 %v220, %v157
        %223 = vrot.lane.b32.xlu0 %v221, 127
        %v224 = vpop.permute.xlu0 %223
        %v226 = vadd.f32 %v218, %v224
        %s227 = sld [smem:[#allocation2 + $0xa]]
        %v228 = vstv %s227
        %v229 = vmul.f32 %v228, %v162
        %231 = vrot.lane.b32.xlu0 %v229, 127
        %v232 = vpop.permute.xlu0 %231
        %v234 = vadd.f32 %v226, %v232
        %s235 = sld [smem:[#allocation2 + $0x13]]
        %v236 = vstv %s235
        %v237 = vmul.f32 %v236, %v167
        %239 = vrot.lane.b32.xlu0 %v237, 127
        %v240 = vpop.permute.xlu0 %239
        %v242 = vadd.f32 %v234, %v240
        %s243 = sld [smem:[#allocation2 + $0x1c]]
        %v244 = vstv %s243
        %v245 = vmul.f32 %v244, %v173
        %247 = vrot.lane.b32.xlu0 %v245, 127
        %v248 = vpop.permute.xlu0 %247
        %v250 = vadd.f32 %v242, %v248
        %s251 = sld [smem:[#allocation2 + $0x25]]
        %v252 = vstv %s251
        %v253 = vmul.f32 %v252, %v178
        %255 = vrot.lane.b32.xlu0 %v253, 127
        %v256 = vpop.permute.xlu0 %255
        %v258 = vadd.f32 %v250, %v256
        %s259 = sld [smem:[#allocation2 + $0x2e]]
        %v260 = vstv %s259
        %v261 = vmul.f32 %v260, %v183
        %263 = vrot.lane.b32.xlu0 %v261, 127
        %v264 = vpop.permute.xlu0 %263
        %v266 = vadd.f32 %v258, %v264
        %s267 = sld [smem:[#allocation2 + $0x37]]
        %v268 = vstv %s267
        %v269 = vmul.f32 %v268, %v189
        %271 = vrot.lane.b32.xlu0 %v269, 127
        %v272 = vpop.permute.xlu0 %271
        %v274 = vadd.f32 %v266, %v272
        %s275 = sld [smem:[#allocation2 + $0x40]]
        %v276 = vstv %s275
        %v277 = vmul.f32 %v276, %v194
        %279 = vrot.lane.b32.xlu0 %v277, 127
        %v280 = vpop.permute.xlu0 %279
        %v282 = vadd.f32 %v274, %v280
        %s283 = sld [smem:[#allocation2 + $0x49]]
        %v284 = vstv %s283
        %v285 = vmul.f32 %v284, %v199
        %287 = vrot.lane.b32.xlu0 %v285, 127
        %v288 = vpop.permute.xlu0 %287
        %v290 = vadd.f32 %v282, %v288
        %s291 = sld [smem:[#allocation2 + $0x52]]
        %v292 = vstv %s291
        %v293 = vmul.f32 %v292, %v205
        %295 = vrot.lane.b32.xlu0 %v293, 127
        %v296 = vpop.permute.xlu0 %295
        %v298 = vadd.f32 %v290, %v296
        %s299 = sld [smem:[#allocation2 + $0x5b]]
        %v300 = vstv %s299
        %v301 = vmul.f32 %v300, %v210
        %303 = vrot.lane.b32.xlu0 %v301, 127
        %v304 = vpop.permute.xlu0 %303
        %v306 = vadd.f32 %v298, %v304
        %s307 = sld [smem:[#allocation2 + $0x64]]
        %v308 = vstv %s307
        %v309 = vmul.f32 %v308, %v215
        %311 = vrot.lane.b32.xlu0 %v309, 127
        %v312 = vpop.permute.xlu0 %311
        %v314 = vadd.f32 %v306, %v312
        %s315 = sld [smem:[#allocation2 + $0x2]]
        %v316 = vstv %s315
        %v317 = vmul.f32 %v316, %v157
        %319 = vrot.lane.b32.xlu0 %v317, 126
        %v320 = vpop.permute.xlu0 %319
        %v322 = vadd.f32 %v314, %v320
        %s323 = sld [smem:[#allocation2 + $0xb]]
        %v324 = vstv %s323
        %v325 = vmul.f32 %v324, %v162
        %327 = vrot.lane.b32.xlu0 %v325, 126
        %v328 = vpop.permute.xlu0 %327
        %v330 = vadd.f32 %v322, %v328
        %s331 = sld [smem:[#allocation2 + $0x14]]
        %v332 = vstv %s331
        %v333 = vmul.f32 %v332, %v167
        %335 = vrot.lane.b32.xlu0 %v333, 126
        %v336 = vpop.permute.xlu0 %335
        %v338 = vadd.f32 %v330, %v336
        %s339 = sld [smem:[#allocation2 + $0x1d]]
        %v340 = vstv %s339
        %v341 = vmul.f32 %v340, %v173
        %343 = vrot.lane.b32.xlu0 %v341, 126
        %v344 = vpop.permute.xlu0 %343
        %v346 = vadd.f32 %v338, %v344
        %s347 = sld [smem:[#allocation2 + $0x26]]
        %v348 = vstv %s347
        %v349 = vmul.f32 %v348, %v178
        %351 = vrot.lane.b32.xlu0 %v349, 126
        %v352 = vpop.permute.xlu0 %351
        %v354 = vadd.f32 %v346, %v352
        %s355 = sld [smem:[#allocation2 + $0x2f]]
        %v356 = vstv %s355
        %v357 = vmul.f32 %v356, %v183
        %359 = vrot.lane.b32.xlu0 %v357, 126
        %v360 = vpop.permute.xlu0 %359
        %v362 = vadd.f32 %v354, %v360
        %s363 = sld [smem:[#allocation2 + $0x38]]
        %v364 = vstv %s363
        %v365 = vmul.f32 %v364, %v189
        %367 = vrot.lane.b32.xlu0 %v365, 126
        %v368 = vpop.permute.xlu0 %367
        %v370 = vadd.f32 %v362, %v368
        %s371 = sld [smem:[#allocation2 + $0x41]]
        %v372 = vstv %s371
        %v373 = vmul.f32 %v372, %v194
        %375 = vrot.lane.b32.xlu0 %v373, 126
        %v376 = vpop.permute.xlu0 %375
        %v378 = vadd.f32 %v370, %v376
        %s379 = sld [smem:[#allocation2 + $0x4a]]
        %v380 = vstv %s379
        %v381 = vmul.f32 %v380, %v199
        %383 = vrot.lane.b32.xlu0 %v381, 126
        %v384 = vpop.permute.xlu0 %383
        %v386 = vadd.f32 %v378, %v384
        %s387 = sld [smem:[#allocation2 + $0x53]]
        %v388 = vstv %s387
        %v389 = vmul.f32 %v388, %v205
        %391 = vrot.lane.b32.xlu0 %v389, 126
        %v392 = vpop.permute.xlu0 %391
        %v394 = vadd.f32 %v386, %v392
        %s395 = sld [smem:[#allocation2 + $0x5c]]
        %v396 = vstv %s395
        %v397 = vmul.f32 %v396, %v210
        %399 = vrot.lane.b32.xlu0 %v397, 126
        %v400 = vpop.permute.xlu0 %399
        %v402 = vadd.f32 %v394, %v400
        %s403 = sld [smem:[#allocation2 + $0x65]]
        %v404 = vstv %s403
        %v405 = vmul.f32 %v404, %v215
        %407 = vrot.lane.b32.xlu0 %v405, 126
        %v408 = vpop.permute.xlu0 %407
        %v410 = vadd.f32 %v402, %v408
        %s411 = sld [smem:[#allocation2 + $0x3]]
        %v412 = vstv %s411
        %v413 = vmul.f32 %v412, %v157
        %415 = vrot.lane.b32.xlu0 %v413, 122
        %v416 = vpop.permute.xlu0 %415
        %v418 = vadd.f32 %v410, %v416
        %s419 = sld [smem:[#allocation2 + $0xc]]
        %v420 = vstv %s419
        %v421 = vmul.f32 %v420, %v162
        %423 = vrot.lane.b32.xlu0 %v421, 122
        %v424 = vpop.permute.xlu0 %423
        %v426 = vadd.f32 %v418, %v424
        %s427 = sld [smem:[#allocation2 + $0x15]]
        %v428 = vstv %s427
        %v429 = vmul.f32 %v428, %v167
        %431 = vrot.lane.b32.xlu0 %v429, 122
        %v432 = vpop.permute.xlu0 %431
        %v434 = vadd.f32 %v426, %v432
        %s435 = sld [smem:[#allocation2 + $0x1e]]
        %v436 = vstv %s435
        %v437 = vmul.f32 %v436, %v173
        %439 = vrot.lane.b32.xlu0 %v437, 122
        %v440 = vpop.permute.xlu0 %439
        %v442 = vadd.f32 %v434, %v440
        %s443 = sld [smem:[#allocation2 + $0x27]]
        %v444 = vstv %s443
        %v445 = vmul.f32 %v444, %v178
        %447 = vrot.lane.b32.xlu0 %v445, 122
        %v448 = vpop.permute.xlu0 %447
        %v450 = vadd.f32 %v442, %v448
        %s451 = sld [smem:[#allocation2 + $0x30]]
        %v452 = vstv %s451
        %v453 = vmul.f32 %v452, %v183
        %455 = vrot.lane.b32.xlu0 %v453, 122
        %v456 = vpop.permute.xlu0 %455
        %v458 = vadd.f32 %v450, %v456
        %s459 = sld [smem:[#allocation2 + $0x39]]
        %v460 = vstv %s459
        %v461 = vmul.f32 %v460, %v189
        %463 = vrot.lane.b32.xlu0 %v461, 122
        %v464 = vpop.permute.xlu0 %463
        %v466 = vadd.f32 %v458, %v464
        %s467 = sld [smem:[#allocation2 + $0x42]]
        %v468 = vstv %s467
        %v469 = vmul.f32 %v468, %v194
        %471 = vrot.lane.b32.xlu0 %v469, 122
        %v472 = vpop.permute.xlu0 %471
        %v474 = vadd.f32 %v466, %v472
        %s475 = sld [smem:[#allocation2 + $0x4b]]
        %v476 = vstv %s475
        %v477 = vmul.f32 %v476, %v199
        %479 = vrot.lane.b32.xlu0 %v477, 122
        %v480 = vpop.permute.xlu0 %479
        %v482 = vadd.f32 %v474, %v480
        %s483 = sld [smem:[#allocation2 + $0x54]]
        %v484 = vstv %s483
        %v485 = vmul.f32 %v484, %v205
        %487 = vrot.lane.b32.xlu0 %v485, 122
        %v488 = vpop.permute.xlu0 %487
        %v490 = vadd.f32 %v482, %v488
        %s491 = sld [smem:[#allocation2 + $0x5d]]
        %v492 = vstv %s491
        %v493 = vmul.f32 %v492, %v210
        %495 = vrot.lane.b32.xlu0 %v493, 122
        %v496 = vpop.permute.xlu0 %495
        %v498 = vadd.f32 %v490, %v496
        %s499 = sld [smem:[#allocation2 + $0x66]]
        %v500 = vstv %s499
        %v501 = vmul.f32 %v500, %v215
        %503 = vrot.lane.b32.xlu0 %v501, 122
        %v504 = vpop.permute.xlu0 %503
        %v506 = vadd.f32 %v498, %v504
        %s507 = sld [smem:[#allocation2 + $0x4]]
        %v508 = vstv %s507
        %v509 = vmul.f32 %v508, %v157
        %511 = vrot.lane.b32.xlu0 %v509, 121
        %v512 = vpop.permute.xlu0 %511
        %v514 = vadd.f32 %v506, %v512
        %s515 = sld [smem:[#allocation2 + $0xd]]
        %v516 = vstv %s515
        %v517 = vmul.f32 %v516, %v162
        %519 = vrot.lane.b32.xlu0 %v517, 121
        %v520 = vpop.permute.xlu0 %519
        %v522 = vadd.f32 %v514, %v520
        %s523 = sld [smem:[#allocation2 + $0x16]]
        %v524 = vstv %s523
        %v525 = vmul.f32 %v524, %v167
        %527 = vrot.lane.b32.xlu0 %v525, 121
        %v528 = vpop.permute.xlu0 %527
        %v530 = vadd.f32 %v522, %v528
        %s531 = sld [smem:[#allocation2 + $0x1f]]
        %v532 = vstv %s531
        %v533 = vmul.f32 %v532, %v173
        %535 = vrot.lane.b32.xlu0 %v533, 121
        %v536 = vpop.permute.xlu0 %535
        %v538 = vadd.f32 %v530, %v536
        %s539 = sld [smem:[#allocation2 + $0x28]]
        %v540 = vstv %s539
        %v541 = vmul.f32 %v540, %v178
        %543 = vrot.lane.b32.xlu0 %v541, 121
        %v544 = vpop.permute.xlu0 %543
        %v546 = vadd.f32 %v538, %v544
        %s547 = sld [smem:[#allocation2 + $0x31]]
        %v548 = vstv %s547
        %v549 = vmul.f32 %v548, %v183
        %551 = vrot.lane.b32.xlu0 %v549, 121
        %v552 = vpop.permute.xlu0 %551
        %v554 = vadd.f32 %v546, %v552
        %s555 = sld [smem:[#allocation2 + $0x3a]]
        %v556 = vstv %s555
        %v557 = vmul.f32 %v556, %v189
        %559 = vrot.lane.b32.xlu0 %v557, 121
        %v560 = vpop.permute.xlu0 %559
        %v562 = vadd.f32 %v554, %v560
        %s563 = sld [smem:[#allocation2 + $0x43]]
        %v564 = vstv %s563
        %v565 = vmul.f32 %v564, %v194
        %567 = vrot.lane.b32.xlu0 %v565, 121
        %v568 = vpop.permute.xlu0 %567
        %v570 = vadd.f32 %v562, %v568
        %s571 = sld [smem:[#allocation2 + $0x4c]]
        %v572 = vstv %s571
        %v573 = vmul.f32 %v572, %v199
        %575 = vrot.lane.b32.xlu0 %v573, 121
        %v576 = vpop.permute.xlu0 %575
        %v578 = vadd.f32 %v570, %v576
        %s579 = sld [smem:[#allocation2 + $0x55]]
        %v580 = vstv %s579
        %v581 = vmul.f32 %v580, %v205
        %583 = vrot.lane.b32.xlu0 %v581, 121
        %v584 = vpop.permute.xlu0 %583
        %v586 = vadd.f32 %v578, %v584
        %s587 = sld [smem:[#allocation2 + $0x5e]]
        %v588 = vstv %s587
        %v589 = vmul.f32 %v588, %v210
        %591 = vrot.lane.b32.xlu0 %v589, 121
        %v592 = vpop.permute.xlu0 %591
        %v594 = vadd.f32 %v586, %v592
        %s595 = sld [smem:[#allocation2 + $0x67]]
        %v596 = vstv %s595
        %v597 = vmul.f32 %v596, %v215
        %599 = vrot.lane.b32.xlu0 %v597, 121
        %v600 = vpop.permute.xlu0 %599
        %v602 = vadd.f32 %v594, %v600
        %s603 = sld [smem:[#allocation2 + $0x5]]
        %v604 = vstv %s603
        %v605 = vmul.f32 %v604, %v157
        %607 = vrot.lane.b32.xlu0 %v605, 120
        %v608 = vpop.permute.xlu0 %607
        %v610 = vadd.f32 %v602, %v608
        %s611 = sld [smem:[#allocation2 + $0xe]]
        %v612 = vstv %s611
        %v613 = vmul.f32 %v612, %v162
        %615 = vrot.lane.b32.xlu0 %v613, 120
        %v616 = vpop.permute.xlu0 %615
        %v618 = vadd.f32 %v610, %v616
        %s619 = sld [smem:[#allocation2 + $0x17]]
        %v620 = vstv %s619
        %v621 = vmul.f32 %v620, %v167
        %623 = vrot.lane.b32.xlu0 %v621, 120
        %v624 = vpop.permute.xlu0 %623
        %v626 = vadd.f32 %v618, %v624
        %s627 = sld [smem:[#allocation2 + $0x20]]
        %v628 = vstv %s627
        %v629 = vmul.f32 %v628, %v173
        %631 = vrot.lane.b32.xlu0 %v629, 120
        %v632 = vpop.permute.xlu0 %631
        %v634 = vadd.f32 %v626, %v632
        %s635 = sld [smem:[#allocation2 + $0x29]]
        %v636 = vstv %s635
        %v637 = vmul.f32 %v636, %v178
        %639 = vrot.lane.b32.xlu0 %v637, 120
        %v640 = vpop.permute.xlu0 %639
        %v642 = vadd.f32 %v634, %v640
        %s643 = sld [smem:[#allocation2 + $0x32]]
        %v644 = vstv %s643
        %v645 = vmul.f32 %v644, %v183
        %647 = vrot.lane.b32.xlu0 %v645, 120
        %v648 = vpop.permute.xlu0 %647
        %v650 = vadd.f32 %v642, %v648
        %s651 = sld [smem:[#allocation2 + $0x3b]]
        %v652 = vstv %s651
        %v653 = vmul.f32 %v652, %v189
        %655 = vrot.lane.b32.xlu0 %v653, 120
        %v656 = vpop.permute.xlu0 %655
        %v658 = vadd.f32 %v650, %v656
        %s659 = sld [smem:[#allocation2 + $0x44]]
        %v660 = vstv %s659
        %v661 = vmul.f32 %v660, %v194
        %663 = vrot.lane.b32.xlu0 %v661, 120
        %v664 = vpop.permute.xlu0 %663
        %v666 = vadd.f32 %v658, %v664
        %s667 = sld [smem:[#allocation2 + $0x4d]]
        %v668 = vstv %s667
        %v669 = vmul.f32 %v668, %v199
        %671 = vrot.lane.b32.xlu0 %v669, 120
        %v672 = vpop.permute.xlu0 %671
        %v674 = vadd.f32 %v666, %v672
        %s675 = sld [smem:[#allocation2 + $0x56]]
        %v676 = vstv %s675
        %v677 = vmul.f32 %v676, %v205
        %679 = vrot.lane.b32.xlu0 %v677, 120
        %v680 = vpop.permute.xlu0 %679
        %v682 = vadd.f32 %v674, %v680
        %s683 = sld [smem:[#allocation2 + $0x5f]]
        %v684 = vstv %s683
        %v685 = vmul.f32 %v684, %v210
        %687 = vrot.lane.b32.xlu0 %v685, 120
        %v688 = vpop.permute.xlu0 %687
        %v690 = vadd.f32 %v682, %v688
        %s691 = sld [smem:[#allocation2 + $0x68]]
        %v692 = vstv %s691
        %v693 = vmul.f32 %v692, %v215
        %695 = vrot.lane.b32.xlu0 %v693, 120
        %v696 = vpop.permute.xlu0 %695
        %v698 = vadd.f32 %v690, %v696
        %s699 = sld [smem:[#allocation2 + $0x6]]
        %v700 = vstv %s699
        %v701 = vmul.f32 %v700, %v157
        %703 = vrot.lane.b32.xlu0 %v701, 116
        %v704 = vpop.permute.xlu0 %703
        %v706 = vadd.f32 %v698, %v704
        %s707 = sld [smem:[#allocation2 + $0xf]]
        %v708 = vstv %s707
        %v709 = vmul.f32 %v708, %v162
        %711 = vrot.lane.b32.xlu0 %v709, 116
        %v712 = vpop.permute.xlu0 %711
        %v714 = vadd.f32 %v706, %v712
        %s715 = sld [smem:[#allocation2 + $0x18]]
        %v716 = vstv %s715
        %v717 = vmul.f32 %v716, %v167
        %719 = vrot.lane.b32.xlu0 %v717, 116
        %v720 = vpop.permute.xlu0 %719
        %v722 = vadd.f32 %v714, %v720
        %s723 = sld [smem:[#allocation2 + $0x21]]
        %v724 = vstv %s723
        %v725 = vmul.f32 %v724, %v173
        %727 = vrot.lane.b32.xlu0 %v725, 116
        %v728 = vpop.permute.xlu0 %727
        %v730 = vadd.f32 %v722, %v728
        %s731 = sld [smem:[#allocation2 + $0x2a]]
        %v732 = vstv %s731
        %v733 = vmul.f32 %v732, %v178
        %735 = vrot.lane.b32.xlu0 %v733, 116
        %v736 = vpop.permute.xlu0 %735
        %v738 = vadd.f32 %v730, %v736
        %s739 = sld [smem:[#allocation2 + $0x33]]
        %v740 = vstv %s739
        %v741 = vmul.f32 %v740, %v183
        %743 = vrot.lane.b32.xlu0 %v741, 116
        %v744 = vpop.permute.xlu0 %743
        %v746 = vadd.f32 %v738, %v744
        %s747 = sld [smem:[#allocation2 + $0x3c]]
        %v748 = vstv %s747
        %v749 = vmul.f32 %v748, %v189
        %751 = vrot.lane.b32.xlu0 %v749, 116
        %v752 = vpop.permute.xlu0 %751
        %v754 = vadd.f32 %v746, %v752
        %s755 = sld [smem:[#allocation2 + $0x45]]
        %v756 = vstv %s755
        %v757 = vmul.f32 %v756, %v194
        %759 = vrot.lane.b32.xlu0 %v757, 116
        %v760 = vpop.permute.xlu0 %759
        %v762 = vadd.f32 %v754, %v760
        %s763 = sld [smem:[#allocation2 + $0x4e]]
        %v764 = vstv %s763
        %v765 = vmul.f32 %v764, %v199
        %767 = vrot.lane.b32.xlu0 %v765, 116
        %v768 = vpop.permute.xlu0 %767
        %v770 = vadd.f32 %v762, %v768
        %s771 = sld [smem:[#allocation2 + $0x57]]
        %v772 = vstv %s771
        %v773 = vmul.f32 %v772, %v205
        %775 = vrot.lane.b32.xlu0 %v773, 116
        %v776 = vpop.permute.xlu0 %775
        %v778 = vadd.f32 %v770, %v776
        %s779 = sld [smem:[#allocation2 + $0x60]]
        %v780 = vstv %s779
        %v781 = vmul.f32 %v780, %v210
        %783 = vrot.lane.b32.xlu0 %v781, 116
        %v784 = vpop.permute.xlu0 %783
        %v786 = vadd.f32 %v778, %v784
        %s787 = sld [smem:[#allocation2 + $0x69]]
        %v788 = vstv %s787
        %v789 = vmul.f32 %v788, %v215
        %791 = vrot.lane.b32.xlu0 %v789, 116
        %v792 = vpop.permute.xlu0 %791
        %v794 = vadd.f32 %v786, %v792
        %s795 = sld [smem:[#allocation2 + $0x7]]
        %v796 = vstv %s795
        %v797 = vmul.f32 %v796, %v157
        %799 = vrot.lane.b32.xlu0 %v797, 115
        %v800 = vpop.permute.xlu0 %799
        %v802 = vadd.f32 %v794, %v800
        %s803 = sld [smem:[#allocation2 + $0x10]]
        %v804 = vstv %s803
        %v805 = vmul.f32 %v804, %v162
        %807 = vrot.lane.b32.xlu0 %v805, 115
        %v808 = vpop.permute.xlu0 %807
        %v810 = vadd.f32 %v802, %v808
        %s811 = sld [smem:[#allocation2 + $0x19]]
        %v812 = vstv %s811
        %v813 = vmul.f32 %v812, %v167
        %815 = vrot.lane.b32.xlu0 %v813, 115
        %v816 = vpop.permute.xlu0 %815
        %v818 = vadd.f32 %v810, %v816
        %s819 = sld [smem:[#allocation2 + $0x22]]
        %v820 = vstv %s819
        %v821 = vmul.f32 %v820, %v173
        %823 = vrot.lane.b32.xlu0 %v821, 115
        %v824 = vpop.permute.xlu0 %823
        %v826 = vadd.f32 %v818, %v824
        %s827 = sld [smem:[#allocation2 + $0x2b]]
        %v828 = vstv %s827
        %v829 = vmul.f32 %v828, %v178
        %831 = vrot.lane.b32.xlu0 %v829, 115
        %v832 = vpop.permute.xlu0 %831
        %v834 = vadd.f32 %v826, %v832
        %s835 = sld [smem:[#allocation2 + $0x34]]
        %v836 = vstv %s835
        %v837 = vmul.f32 %v836, %v183
        %839 = vrot.lane.b32.xlu0 %v837, 115
        %v840 = vpop.permute.xlu0 %839
        %v842 = vadd.f32 %v834, %v840
        %s843 = sld [smem:[#allocation2 + $0x3d]]
        %v844 = vstv %s843
        %v845 = vmul.f32 %v844, %v189
        %847 = vrot.lane.b32.xlu0 %v845, 115
        %v848 = vpop.permute.xlu0 %847
        %v850 = vadd.f32 %v842, %v848
        %s851 = sld [smem:[#allocation2 + $0x46]]
        %v852 = vstv %s851
        %v853 = vmul.f32 %v852, %v194
        %855 = vrot.lane.b32.xlu0 %v853, 115
        %v856 = vpop.permute.xlu0 %855
        %v858 = vadd.f32 %v850, %v856
        %s859 = sld [smem:[#allocation2 + $0x4f]]
        %v860 = vstv %s859
        %v861 = vmul.f32 %v860, %v199
        %863 = vrot.lane.b32.xlu0 %v861, 115
        %v864 = vpop.permute.xlu0 %863
        %v866 = vadd.f32 %v858, %v864
        %s867 = sld [smem:[#allocation2 + $0x58]]
        %v868 = vstv %s867
        %v869 = vmul.f32 %v868, %v205
        %871 = vrot.lane.b32.xlu0 %v869, 115
        %v872 = vpop.permute.xlu0 %871
        %v874 = vadd.f32 %v866, %v872
        %s875 = sld [smem:[#allocation2 + $0x61]]
        %v876 = vstv %s875
        %v877 = vmul.f32 %v876, %v210
        %879 = vrot.lane.b32.xlu0 %v877, 115
        %v880 = vpop.permute.xlu0 %879
        %v882 = vadd.f32 %v874, %v880
        %s883 = sld [smem:[#allocation2 + $0x6a]]
        %v884 = vstv %s883
        %v885 = vmul.f32 %v884, %v215
        %887 = vrot.lane.b32.xlu0 %v885, 115
        %v888 = vpop.permute.xlu0 %887
        %v890 = vadd.f32 %v882, %v888
        %s891 = sld [smem:[#allocation2 + $0x8]]
        %v892 = vstv %s891
        %v893 = vmul.f32 %v892, %v157
        %895 = vrot.lane.b32.xlu0 %v893, 114
        %v896 = vpop.permute.xlu0 %895
        %v898 = vadd.f32 %v890, %v896
        %s899 = sld [smem:[#allocation2 + $0x11]]
        %v900 = vstv %s899
        %v901 = vmul.f32 %v900, %v162
        %903 = vrot.lane.b32.xlu0 %v901, 114
        %v904 = vpop.permute.xlu0 %903
        %v906 = vadd.f32 %v898, %v904
        %s907 = sld [smem:[#allocation2 + $0x1a]]
        %v908 = vstv %s907
        %v909 = vmul.f32 %v908, %v167
        %911 = vrot.lane.b32.xlu0 %v909, 114
        %v912 = vpop.permute.xlu0 %911
        %v914 = vadd.f32 %v906, %v912
        %s915 = sld [smem:[#allocation2 + $0x23]]
        %v916 = vstv %s915
        %v917 = vmul.f32 %v916, %v173
        %919 = vrot.lane.b32.xlu0 %v917, 114
        %v920 = vpop.permute.xlu0 %919
        %v922 = vadd.f32 %v914, %v920
        %s923 = sld [smem:[#allocation2 + $0x2c]]
        %v924 = vstv %s923
        %v925 = vmul.f32 %v924, %v178
        %927 = vrot.lane.b32.xlu0 %v925, 114
        %v928 = vpop.permute.xlu0 %927
        %v930 = vadd.f32 %v922, %v928
        %s931 = sld [smem:[#allocation2 + $0x35]]
        %v932 = vstv %s931
        %v933 = vmul.f32 %v932, %v183
        %935 = vrot.lane.b32.xlu0 %v933, 114
        %v936 = vpop.permute.xlu0 %935
        %v938 = vadd.f32 %v930, %v936
        %s939 = sld [smem:[#allocation2 + $0x3e]]
        %v940 = vstv %s939
        %v941 = vmul.f32 %v940, %v189
        %943 = vrot.lane.b32.xlu0 %v941, 114
        %v944 = vpop.permute.xlu0 %943
        %v946 = vadd.f32 %v938, %v944
        %s947 = sld [smem:[#allocation2 + $0x47]]
        %v948 = vstv %s947
        %v949 = vmul.f32 %v948, %v194
        %951 = vrot.lane.b32.xlu0 %v949, 114
        %v952 = vpop.permute.xlu0 %951
        %v954 = vadd.f32 %v946, %v952
        %s955 = sld [smem:[#allocation2 + $0x50]]
        %v956 = vstv %s955
        %v957 = vmul.f32 %v956, %v199
        %959 = vrot.lane.b32.xlu0 %v957, 114
        %v960 = vpop.permute.xlu0 %959
        %v962 = vadd.f32 %v954, %v960
        %s963 = sld [smem:[#allocation2 + $0x59]]
        %v964 = vstv %s963
        %v965 = vmul.f32 %v964, %v205
        %967 = vrot.lane.b32.xlu0 %v965, 114
        %v968 = vpop.permute.xlu0 %967
        %v970 = vadd.f32 %v962, %v968
        %s971 = sld [smem:[#allocation2 + $0x62]]
        %v972 = vstv %s971
        %v973 = vmul.f32 %v972, %v210
        %975 = vrot.lane.b32.xlu0 %v973, 114
        %v976 = vpop.permute.xlu0 %975
        %v978 = vadd.f32 %v970, %v976
        %s979 = sld [smem:[#allocation2 + $0x6b]]
        %v980 = vstv %s979
        %v981 = vmul.f32 %v980, %v215
        %983 = vrot.lane.b32.xlu0 %v981, 114
        %v984 = vpop.permute.xlu0 %983
        %v986 = vadd.f32 %v978, %v984
        %vm987 = vcmask 289792
        %988 = vst.msk [vmem:[%s150] sm:$0xf] %vm987, %v986
        %s989 = sand.u32 %s72, 1
        %s990 = scalar_lea.sflag [#allocation3], %s989
        %s991 = sand.u32 %s72, 1
        %s992 = smul.addr %s991, 4
        %s993 = scalar_lea.vmem [#allocation5], %s992
        // Predicated region
        $region33: #{tpu_custom_call.1} parent=27 // pred_check
          %p994 = pneg %p82
        $region34: #{tpu_custom_call.1} parent=27 // pred_check_branch
          %996 = sbr.rel (%p994) target = $region36
        $region35: #{tpu_custom_call.1} parent=27 // pred_region
          %s998 = ssub.s32 64, 64
          %999 = vsyncadd %s990, %s998
          %s1000 = smul.addr %s17, 64
          %s1001 = scalar_lea.hbm %s2, %s1000
          %s1003 = sshll.u32 %s993, 4
          %s1004 = int_to_ptr.vmem [resolvable:$true] %s1003
          %1006 = dma.vmem_to_hbm [thread:$0]  %s1004, 64, %s1001, %s990
        $region36: #{tpu_custom_call.1} parent=27 // pred_fallthru
          _
      $region28: #{tpu_custom_call.1} parent=5 // pred_fallthru
        _
      %p1007 = scmp.le.s32.totalorder 2, %s12
      // Predicated region
      $region37: #{tpu_custom_call.1} parent=5 // pred_check
        %p1008 = pneg %p1007
      $region38: #{tpu_custom_call.1} parent=5 // pred_check_branch
        %1010 = sbr.rel (%p1008) target = $region40
      $region39: #{tpu_custom_call.1} parent=5 // pred_region
        %s1011 = ssub.s32 %s12, 2
        // Predicated region
        $region41: #{tpu_custom_call.1} parent=39 // pred_check
          %p1012 = pneg %p88
        $region42: #{tpu_custom_call.1} parent=39 // pred_check_branch
          %1014 = sbr.rel (%p1012) target = $region44
        $region43: #{tpu_custom_call.1} parent=39 // pred_region
          %s1015 = sand.u32 %s73, 1
          %s1016 = scalar_lea.sflag [#allocation3], %s1015
          %s1017 = sand.u32 %s73, 1
          %s1018 = smul.addr %s1017, 4
          %s1019 = scalar_lea.vmem [#allocation5], %s1018
          %1020 = dma.done %s1016, 64
        $region44: #{tpu_custom_call.1} parent=39 // pred_fallthru
          _
      $region40: #{tpu_custom_call.1} parent=5 // pred_fallthru
        _
    $region6: #{tpu_custom_call.1} parent=1 // loop_footer
      %s16 = sadd.s32 1, %s12
    $region7: #{tpu_custom_call.1} parent=1 // loop_footer_branch
      %11 = sbr.rel target = $region3
    $region8: #{tpu_custom_call.1} parent=1 // loop_exit
      _
    %1021 = vsyncpa [#allocation3], 1
    %s1022 = scalar_lea.sflag [#allocation3], 1
    %1023 = vsyncpa %s1022, 1
    %1024 = vsyncpa [#allocation4], 1
    %s1025 = scalar_lea.sflag [#allocation4], 1
    %1026 = vsyncpa %s1025, 1

</llo_original>
